<compile_context>
chip_gen: v6e
topology: v6e:2x2x1
jax: 0.10.0
libtpu: 0.0.40
codegen_flags: <defaults>
</compile_context>

<pallas_src>
import functools
import math

import jax
import jax.numpy as jnp
from jax.experimental import pallas as pl
from jax.experimental.pallas import tpu as pltpu

_NEG_BIG = -1e30  # masked-logit / padded-class fill (finite to avoid inf-inf)


def _round_up(x, m):
    return (x + m - 1) // m * m


# ----------------------------------------------------------------------------
# Kernel: masked GAT attention + aggregation for one destination-row tile.
#   s[i, j] = LeakyReLU(<a_dst, h_i> + <a_src, h_j>) + adj_bias[i, j]
#   out[i]  = softmax_j(s[i, :]) @ H + b        (then ReLU or log_softmax)
# ----------------------------------------------------------------------------
def _gat_attend_kernel(sdst_ref, ssrc_ref, h_ref, b_ref, adjb_ref, out_ref, *,
                       final):
    s = sdst_ref[...] + ssrc_ref[...]                    # (tm, N) f32
    s = jnp.maximum(s, 0.2 * s)                          # LeakyReLU(0.2)
    s = s + adjb_ref[...].astype(jnp.float32)            # additive mask 0/-1e30
    s_max = jnp.max(s, axis=-1, keepdims=True)
    p = jnp.exp(s - s_max)                               # masked -> exactly 0
    denom = jnp.sum(p, axis=-1, keepdims=True)
    p = p * pl.reciprocal(denom, approx=final)           # EUP recip in layer 2
    agg = jnp.dot(p.astype(jnp.bfloat16), h_ref[...],
                  preferred_element_type=jnp.float32)    # (tm, F) MXU, f32 acc
    val = agg + b_ref[...]
    if final:
        # fused log_softmax over classes (padded classes carry bias -1e30)
        m = jnp.max(val, axis=-1, keepdims=True)
        z = val - m
        lse = jnp.log(jnp.sum(jnp.exp(z), axis=-1, keepdims=True))
        out_ref[...] = (z - lse).astype(out_ref.dtype)
    else:
        out_ref[...] = jnp.maximum(val, 0.0).astype(out_ref.dtype)  # ReLU


def _gat_attention_layer(sdst, ssrc, h, b, adj_bias, *, tm, out_dtype, final,
                         interpret=False):
    n_pad, f_pad = h.shape
    r = n_pad // tm
    kernel = functools.partial(_gat_attend_kernel, final=final)
    return pl.pallas_call(
        kernel,
        out_shape=jax.ShapeDtypeStruct((n_pad, f_pad), out_dtype),
        grid=(r,),
        in_specs=[
            pl.BlockSpec((tm, 1), lambda i: (i, 0)),          # s_dst tile
            pl.BlockSpec((1, n_pad), lambda i: (0, 0)),       # s_src (const)
            pl.BlockSpec((n_pad, f_pad), lambda i: (0, 0)),   # H (const, bf16)
            pl.BlockSpec((1, f_pad), lambda i: (0, 0)),       # bias (const)
            pl.BlockSpec((tm, n_pad), lambda i: (i, 0)),      # adj-bias strip
        ],
        out_specs=pl.BlockSpec((tm, f_pad), lambda i: (i, 0)),
        compiler_params=pltpu.CompilerParams(
            dimension_semantics=("parallel",),                # v7x: both TCs
        ),
        interpret=interpret,
    )(sdst, ssrc, h, b, adj_bias)


# ----------------------------------------------------------------------------
# Wrapper: conv1 -> relu -> dropout(eval: identity) -> conv2 -> log_softmax
# ----------------------------------------------------------------------------
def gat_net_forward(x, adj, params, *, tm=128, interpret=False):
    # TODO(synk): F.dropout in training mode (random mask) not implemented;
    #             inference-mode forward treats dropout as identity.
    n, f_in = x.shape
    hid = params["w1"].shape[1]
    c = params["w2"].shape[1]

    f32, bf16 = jnp.float32, jnp.bfloat16
    tm = max(16, (tm // 16) * 16)                  # bf16 sublane alignment
    n_pad = _round_up(n, math.lcm(tm, 128))        # lane-dense source axis
    h_pad = _round_up(max(hid, 128), 128)          # lane-dense hidden axis
    c_pad = _round_up(max(c, 128), 128)            # lane-dense class axis

    # Additive attention mask: 0 where dst attends src, -1e30 otherwise.
    # Every node (incl. padded) gets a self loop; real rows never attend to
    # padded columns, so padding cannot leak into real outputs.
    adj_bias = jnp.full((n_pad, n_pad), _NEG_BIG, f32)
    adj_bias = adj_bias.at[:n, :n].set(jnp.where(adj > 0, 0.0, _NEG_BIG))
    diag = jnp.arange(n_pad)
    adj_bias = adj_bias.at[diag, diag].set(0.0)
    adj_bias = adj_bias.astype(bf16)

    x_p = jnp.zeros((n_pad, f_in), f32).at[:n].set(x.astype(f32))

    # ---- layer 1: projection + per-node scores hoisted to XLA (f32) --------
    w1 = jnp.zeros((f_in, h_pad), f32).at[:, :hid].set(params["w1"].astype(f32))
    a_src1 = jnp.zeros((h_pad,), f32).at[:hid].set(
        params["a_src1"].reshape(-1).astype(f32))
    a_dst1 = jnp.zeros((h_pad,), f32).at[:hid].set(
        params["a_dst1"].reshape(-1).astype(f32))
    b1 = jnp.zeros((1, h_pad), f32).at[:, :hid].set(
        params["b1"].reshape(1, -1).astype(f32))

    h1 = x_p @ w1                                        # (n_pad, h_pad) f32
    ssrc1 = jnp.sum(h1 * a_src1, axis=-1)[None, :]       # (1, n_pad)
    sdst1 = jnp.sum(h1 * a_dst1, axis=-1)[:, None]       # (n_pad, 1)

    out1 = _gat_attention_layer(sdst1, ssrc1, h1.astype(bf16), b1, adj_bias,
                                tm=tm, out_dtype=bf16, final=False,
                                interpret=interpret)     # relu(conv1), bf16

    # dropout: inference mode -> identity

    # ---- layer 2 ------------------------------------------------------------
    w2 = jnp.zeros((h_pad, c_pad), f32).at[:hid, :c].set(params["w2"].astype(f32))
    a_src2 = jnp.zeros((c_pad,), f32).at[:c].set(
        params["a_src2"].reshape(-1).astype(f32))
    a_dst2 = jnp.zeros((c_pad,), f32).at[:c].set(
        params["a_dst2"].reshape(-1).astype(f32))
    # padded classes get bias -1e30 so the fused log_softmax ignores them
    b2 = jnp.full((1, c_pad), _NEG_BIG, f32).at[:, :c].set(
        params["b2"].reshape(1, -1).astype(f32))

    h2 = out1.astype(f32) @ w2                           # (n_pad, c_pad) f32
    ssrc2 = jnp.sum(h2 * a_src2, axis=-1)[None, :]
    sdst2 = jnp.sum(h2 * a_dst2, axis=-1)[:, None]

    out = _gat_attention_layer(sdst2, ssrc2, h2.astype(bf16), b2, adj_bias,
                               tm=tm, out_dtype=f32, final=True,
                               interpret=interpret)      # log_softmax logits
    return out[:n, :c]


# ----------------------------------------------------------------------------
# Params / adjacency helpers and a pure-JAX reference
# ----------------------------------------------------------------------------
def glorot(key, shape):
    fan_in, fan_out = shape[-2], shape[-1]
    limit = jnp.sqrt(6.0 / (fan_in + fan_out))
    return jax.random.uniform(key, shape, jnp.float32, -limit, limit)


def init_params(key, input_size, hid_size, class_size):
    ks = jax.random.split(key, 6)
    return {
        "w1": glorot(ks[0], (input_size, hid_size)),
        "a_src1": glorot(ks[1], (1, hid_size)),
        "a_dst1": glorot(ks[2], (1, hid_size)),
        "b1": jnp.zeros((1, hid_size), jnp.float32),
        "w2": glorot(ks[3], (hid_size, class_size)),
        "a_src2": glorot(ks[4], (1, class_size)),
        "a_dst2": glorot(ks[5], (1, class_size)),
        "b2": jnp.zeros((1, class_size), jnp.float32),
    }


def edges_to_dense_adj(edges_index, num_nodes):
    # adj[dst, src] = 1.0 ; GATConv adds (exactly one) self loop per node.
    src, dst = edges_index[0], edges_index[1]
    adj = jnp.zeros((num_nodes, num_nodes), jnp.float32)
    adj = adj.at[dst, src].set(1.0)
    diag = jnp.arange(num_nodes)
    adj = adj.at[diag, diag].set(1.0)
    return adj


def _gat_layer_ref(x, w, a_src, a_dst, b, adj):
    h = x @ w
    alpha_dst = jnp.sum(h * a_dst, axis=-1, keepdims=True)      # (N, 1)
    alpha_src = jnp.sum(h * a_src, axis=-1, keepdims=True)      # (N, 1)
    s = alpha_dst + alpha_src.T                                  # s[i, j]
    s = jnp.where(s >= 0.0, s, 0.2 * s)
    s = jnp.where(adj > 0.0, s, -jnp.inf)
    p = jax.nn.softmax(s, axis=-1)
    return p @ h + b


def gat_net_reference(x, adj, params):
    h = jax.nn.relu(_gat_layer_ref(x, params["w1"], params["a_src1"],
                                   params["a_dst1"], params["b1"], adj))
    out = _gat_layer_ref(h, params["w2"], params["a_src2"],
                         params["a_dst2"], params["b2"], adj)
    return jax.nn.log_softmax(out, axis=1)


if __name__ == "__main__":
    N = 200           # nodes (pads to 256 -> 2 row tiles of 128)
    INPUT_SIZE = 16
    HID_SIZE = 32
    CLASS_SIZE = 8
    E = 800           # random edges

    key = jax.random.PRNGKey(0)
    k_x, k_src, k_dst, k_p = jax.random.split(key, 4)

    x = jax.random.normal(k_x, (N, INPUT_SIZE), jnp.float32)
    src = jax.random.randint(k_src, (E,), 0, N, jnp.int32)
    dst = jax.random.randint(k_dst, (E,), 0, N, jnp.int32)
    edges_index = jnp.stack([src, dst])                 # (2, E)

    adj = edges_to_dense_adj(edges_index, N)
    params = init_params(k_p, INPUT_SIZE, HID_SIZE, CLASS_SIZE)

    fwd = jax.jit(gat_net_forward)
    out = fwd(x, adj, params)
    jax.block_until_ready(out)

    assert out.shape == (N, CLASS_SIZE)
    assert bool(jnp.all(jnp.isfinite(out)))
    # rows of log_softmax must exp-sum to 1
    assert bool(jnp.allclose(jnp.sum(jnp.exp(out), axis=1), 1.0, atol=1e-3))
    # compare with a pure-JAX f32 reference (bf16 MXU + approx recip tolerance)
    ref = gat_net_reference(x, adj, params)
    err = float(jnp.max(jnp.abs(out - ref)))
    assert err < 0.2, f"mismatch vs reference: {err}"
    print("KERNEL_OK")
</pallas_src>

<mosaic_0001>
module attributes {stable_mosaic.version = 11 : i64} {
  func.func @_gat_attend_kernel(%arg0: i32, %arg1: memref<128x1xf32, #tpu.memory_space<vmem>>, %arg2: memref<1x256xf32, #tpu.memory_space<vmem>>, %arg3: memref<256x128xbf16, #tpu.memory_space<vmem>>, %arg4: memref<1x128xf32, #tpu.memory_space<vmem>>, %arg5: memref<128x256xbf16, #tpu.memory_space<vmem>>, %arg6: memref<128x128xbf16, #tpu.memory_space<vmem>>) attributes {dimension_semantics = [#tpu.dimension_semantics<parallel>], iteration_bounds = array<i64: 2>, scalar_prefetch = 0 : i64, scratch_operands = 0 : i64, tpu.core_type = #tpu.core_type<tc>, window_params = [{transform_indices = @transform_0, window_bounds = array<i64: 128, 1>}, {pipeline_mode = #tpu.pipeline_mode<synchronous>, transform_indices = @transform_1, window_bounds = array<i64: 1, 256>}, {pipeline_mode = #tpu.pipeline_mode<synchronous>, transform_indices = @transform_2, window_bounds = array<i64: 256, 128>}, {pipeline_mode = #tpu.pipeline_mode<synchronous>, transform_indices = @transform_3, window_bounds = array<i64: 1, 128>}, {transform_indices = @transform_4, window_bounds = array<i64: 128, 256>}, {transform_indices = @transform_5, window_bounds = array<i64: 128, 128>}]} {
    %c0 = arith.constant 0 : index
    %c0_0 = arith.constant 0 : index
    %0 = vector.load %arg1[%c0, %c0_0] : memref<128x1xf32, #tpu.memory_space<vmem>>, vector<128x1xf32>
    %c0_1 = arith.constant 0 : index
    %c0_2 = arith.constant 0 : index
    %1 = vector.load %arg2[%c0_1, %c0_2] : memref<1x256xf32, #tpu.memory_space<vmem>>, vector<1x256xf32>
    %2 = vector.broadcast %0 : vector<128x1xf32> to vector<128x256xf32>
    %3 = vector.broadcast %1 : vector<1x256xf32> to vector<128x256xf32>
    %4 = arith.addf %2, %3 : vector<128x256xf32>
    %cst = arith.constant 2.000000e-01 : f32
    %5 = vector.broadcast %cst : f32 to vector<128x256xf32>
    %6 = arith.mulf %5, %4 : vector<128x256xf32>
    %7 = arith.maximumf %4, %6 : vector<128x256xf32>
    %c0_3 = arith.constant 0 : index
    %c0_4 = arith.constant 0 : index
    %8 = vector.load %arg5[%c0_3, %c0_4] : memref<128x256xbf16, #tpu.memory_space<vmem>>, vector<128x256xbf16>
    %9 = arith.extf %8 : vector<128x256xbf16> to vector<128x256xf32>
    %10 = arith.addf %7, %9 : vector<128x256xf32>
    %cst_5 = arith.constant dense<0xFF800000> : vector<128xf32>
    %11 = vector.multi_reduction <maximumf>, %10, %cst_5 [1] : vector<128x256xf32> to vector<128xf32>
    %12 = vector.shape_cast %11 : vector<128xf32> to vector<128x1xf32>
    %13 = vector.broadcast %12 : vector<128x1xf32> to vector<128x256xf32>
    %14 = arith.subf %10, %13 : vector<128x256xf32>
    %15 = math.exp %14 : vector<128x256xf32>
    %cst_6 = arith.constant dense<0.000000e+00> : vector<128xf32>
    %16 = vector.multi_reduction <add>, %15, %cst_6 [1] : vector<128x256xf32> to vector<128xf32>
    %17 = vector.shape_cast %16 : vector<128xf32> to vector<128x1xf32>
    %18 = tpu.reciprocal %17 : vector<128x1xf32> -> vector<128x1xf32>
    %19 = vector.broadcast %18 : vector<128x1xf32> to vector<128x256xf32>
    %20 = arith.mulf %15, %19 : vector<128x256xf32>
    %21 = arith.truncf %20 : vector<128x256xf32> to vector<128x256xbf16>
    %c0_7 = arith.constant 0 : index
    %c0_8 = arith.constant 0 : index
    %22 = vector.load %arg3[%c0_7, %c0_8] : memref<256x128xbf16, #tpu.memory_space<vmem>>, vector<256x128xbf16>
    %cst_9 = arith.constant dense<0.000000e+00> : vector<128x128xf32>
    %23 = tpu.matmul %21, %22, %cst_9 {dimension_numbers = #tpu.dot_dimension_numbers<[1], [0], [0], [1], [0, 0, 1, 1], [], []>} : vector<128x256xbf16>, vector<256x128xbf16>, vector<128x128xf32> -> vector<128x128xf32>
    %c0_10 = arith.constant 0 : index
    %c0_11 = arith.constant 0 : index
    %24 = vector.load %arg4[%c0_10, %c0_11] : memref<1x128xf32, #tpu.memory_space<vmem>>, vector<1x128xf32>
    %25 = vector.broadcast %24 : vector<1x128xf32> to vector<128x128xf32>
    %26 = arith.addf %23, %25 : vector<128x128xf32>
    %cst_12 = arith.constant 0.000000e+00 : f32
    %27 = vector.broadcast %cst_12 : f32 to vector<128x128xf32>
    %28 = arith.maximumf %26, %27 : vector<128x128xf32>
    %29 = arith.truncf %28 : vector<128x128xf32> to vector<128x128xbf16>
    %c0_13 = arith.constant 0 : index
    %c0_14 = arith.constant 0 : index
    %30 = vector.load %arg6[%c0_13, %c0_14] : memref<128x128xbf16, #tpu.memory_space<vmem>>, vector<128x128xbf16>
    tpu.vector_store %arg6[%c0_13, %c0_14], %29 {strides = array<i32>} : memref<128x128xbf16, #tpu.memory_space<vmem>>, vector<128x128xbf16>,
    return
  }
  func.func @transform_0(%arg0: i32) -> (i32, i32) {
    %c0_i32 = arith.constant 0 : i32
    %c0_i32_0 = arith.constant 0 : i32
    return %arg0, %c0_i32 : i32, i32
  }
  func.func @transform_1(%arg0: i32) -> (i32, i32) {
    %c0_i32 = arith.constant 0 : i32
    %c0_i32_0 = arith.constant 0 : i32
    %c0_i32_1 = arith.constant 0 : i32
    return %c0_i32, %c0_i32_0 : i32, i32
  }
  func.func @transform_2(%arg0: i32) -> (i32, i32) {
    %c0_i32 = arith.constant 0 : i32
    %c0_i32_0 = arith.constant 0 : i32
    %c0_i32_1 = arith.constant 0 : i32
    return %c0_i32, %c0_i32_0 : i32, i32
  }
  func.func @transform_3(%arg0: i32) -> (i32, i32) {
    %c0_i32 = arith.constant 0 : i32
    %c0_i32_0 = arith.constant 0 : i32
    %c0_i32_1 = arith.constant 0 : i32
    return %c0_i32, %c0_i32_0 : i32, i32
  }
  func.func @transform_4(%arg0: i32) -> (i32, i32) {
    %c0_i32 = arith.constant 0 : i32
    %c0_i32_0 = arith.constant 0 : i32
    return %arg0, %c0_i32 : i32, i32
  }
  func.func @transform_5(%arg0: i32) -> (i32, i32) {
    %c0_i32 = arith.constant 0 : i32
    %c0_i32_0 = arith.constant 0 : i32
    return %arg0, %c0_i32 : i32, i32
  }
}

module attributes {stable_mosaic.version = 11 : i64} {
  func.func @_gat_attend_kernel(%arg0: i32, %arg1: memref<128x1xf32, #tpu.memory_space<vmem>>, %arg2: memref<1x256xf32, #tpu.memory_space<vmem>>, %arg3: memref<256x128xbf16, #tpu.memory_space<vmem>>, %arg4: memref<1x128xf32, #tpu.memory_space<vmem>>, %arg5: memref<128x256xbf16, #tpu.memory_space<vmem>>, %arg6: memref<128x128xf32, #tpu.memory_space<vmem>>) attributes {dimension_semantics = [#tpu.dimension_semantics<parallel>], iteration_bounds = array<i64: 2>, scalar_prefetch = 0 : i64, scratch_operands = 0 : i64, tpu.core_type = #tpu.core_type<tc>, window_params = [{transform_indices = @transform_0, window_bounds = array<i64: 128, 1>}, {pipeline_mode = #tpu.pipeline_mode<synchronous>, transform_indices = @transform_1, window_bounds = array<i64: 1, 256>}, {pipeline_mode = #tpu.pipeline_mode<synchronous>, transform_indices = @transform_2, window_bounds = array<i64: 256, 128>}, {pipeline_mode = #tpu.pipeline_mode<synchronous>, transform_indices = @transform_3, window_bounds = array<i64: 1, 128>}, {transform_indices = @transform_4, window_bounds = array<i64: 128, 256>}, {transform_indices = @transform_5, window_bounds = array<i64: 128, 128>}]} {
    %c0 = arith.constant 0 : index
    %c0_0 = arith.constant 0 : index
    %0 = vector.load %arg1[%c0, %c0_0] : memref<128x1xf32, #tpu.memory_space<vmem>>, vector<128x1xf32>
    %c0_1 = arith.constant 0 : index
    %c0_2 = arith.constant 0 : index
    %1 = vector.load %arg2[%c0_1, %c0_2] : memref<1x256xf32, #tpu.memory_space<vmem>>, vector<1x256xf32>
    %2 = vector.broadcast %0 : vector<128x1xf32> to vector<128x256xf32>
    %3 = vector.broadcast %1 : vector<1x256xf32> to vector<128x256xf32>
    %4 = arith.addf %2, %3 : vector<128x256xf32>
    %cst = arith.constant 2.000000e-01 : f32
    %5 = vector.broadcast %cst : f32 to vector<128x256xf32>
    %6 = arith.mulf %5, %4 : vector<128x256xf32>
    %7 = arith.maximumf %4, %6 : vector<128x256xf32>
    %c0_3 = arith.constant 0 : index
    %c0_4 = arith.constant 0 : index
    %8 = vector.load %arg5[%c0_3, %c0_4] : memref<128x256xbf16, #tpu.memory_space<vmem>>, vector<128x256xbf16>
    %9 = arith.extf %8 : vector<128x256xbf16> to vector<128x256xf32>
    %10 = arith.addf %7, %9 : vector<128x256xf32>
    %cst_5 = arith.constant dense<0xFF800000> : vector<128xf32>
    %11 = vector.multi_reduction <maximumf>, %10, %cst_5 [1] : vector<128x256xf32> to vector<128xf32>
    %12 = vector.shape_cast %11 : vector<128xf32> to vector<128x1xf32>
    %13 = vector.broadcast %12 : vector<128x1xf32> to vector<128x256xf32>
    %14 = arith.subf %10, %13 : vector<128x256xf32>
    %15 = math.exp %14 : vector<128x256xf32>
    %cst_6 = arith.constant dense<0.000000e+00> : vector<128xf32>
    %16 = vector.multi_reduction <add>, %15, %cst_6 [1] : vector<128x256xf32> to vector<128xf32>
    %17 = vector.shape_cast %16 : vector<128xf32> to vector<128x1xf32>
    %18 = tpu.reciprocal %17 {approx = true} : vector<128x1xf32> -> vector<128x1xf32>
    %19 = vector.broadcast %18 : vector<128x1xf32> to vector<128x256xf32>
    %20 = arith.mulf %15, %19 : vector<128x256xf32>
    %21 = arith.truncf %20 : vector<128x256xf32> to vector<128x256xbf16>
    %c0_7 = arith.constant 0 : index
    %c0_8 = arith.constant 0 : index
    %22 = vector.load %arg3[%c0_7, %c0_8] : memref<256x128xbf16, #tpu.memory_space<vmem>>, vector<256x128xbf16>
    %cst_9 = arith.constant dense<0.000000e+00> : vector<128x128xf32>
    %23 = tpu.matmul %21, %22, %cst_9 {dimension_numbers = #tpu.dot_dimension_numbers<[1], [0], [0], [1], [0, 0, 1, 1], [], []>} : vector<128x256xbf16>, vector<256x128xbf16>, vector<128x128xf32> -> vector<128x128xf32>
    %c0_10 = arith.constant 0 : index
    %c0_11 = arith.constant 0 : index
    %24 = vector.load %arg4[%c0_10, %c0_11] : memref<1x128xf32, #tpu.memory_space<vmem>>, vector<1x128xf32>
    %25 = vector.broadcast %24 : vector<1x128xf32> to vector<128x128xf32>
    %26 = arith.addf %23, %25 : vector<128x128xf32>
    %cst_12 = arith.constant dense<0xFF800000> : vector<128xf32>
    %27 = vector.multi_reduction <maximumf>, %26, %cst_12 [1] : vector<128x128xf32> to vector<128xf32>
    %28 = vector.shape_cast %27 : vector<128xf32> to vector<128x1xf32>
    %29 = vector.broadcast %28 : vector<128x1xf32> to vector<128x128xf32>
    %30 = arith.subf %26, %29 : vector<128x128xf32>
    %31 = math.exp %30 : vector<128x128xf32>
    %cst_13 = arith.constant dense<0.000000e+00> : vector<128xf32>
    %32 = vector.multi_reduction <add>, %31, %cst_13 [1] : vector<128x128xf32> to vector<128xf32>
    %33 = vector.shape_cast %32 : vector<128xf32> to vector<128x1xf32>
    %34 = math.log %33 : vector<128x1xf32>
    %35 = vector.broadcast %34 : vector<128x1xf32> to vector<128x128xf32>
    %36 = arith.subf %30, %35 : vector<128x128xf32>
    %c0_14 = arith.constant 0 : index
    %c0_15 = arith.constant 0 : index
    %37 = vector.load %arg6[%c0_14, %c0_15] : memref<128x128xf32, #tpu.memory_space<vmem>>, vector<128x128xf32>
    tpu.vector_store %arg6[%c0_14, %c0_15], %36 {strides = array<i32>} : memref<128x128xf32, #tpu.memory_space<vmem>>, vector<128x128xf32>,
    return
  }
  func.func @transform_0(%arg0: i32) -> (i32, i32) {
    %c0_i32 = arith.constant 0 : i32
    %c0_i32_0 = arith.constant 0 : i32
    return %arg0, %c0_i32 : i32, i32
  }
  func.func @transform_1(%arg0: i32) -> (i32, i32) {
    %c0_i32 = arith.constant 0 : i32
    %c0_i32_0 = arith.constant 0 : i32
    %c0_i32_1 = arith.constant 0 : i32
    return %c0_i32, %c0_i32_0 : i32, i32
  }
  func.func @transform_2(%arg0: i32) -> (i32, i32) {
    %c0_i32 = arith.constant 0 : i32
    %c0_i32_0 = arith.constant 0 : i32
    %c0_i32_1 = arith.constant 0 : i32
    return %c0_i32, %c0_i32_0 : i32, i32
  }
  func.func @transform_3(%arg0: i32) -> (i32, i32) {
    %c0_i32 = arith.constant 0 : i32
    %c0_i32_0 = arith.constant 0 : i32
    %c0_i32_1 = arith.constant 0 : i32
    return %c0_i32, %c0_i32_0 : i32, i32
  }
  func.func @transform_4(%arg0: i32) -> (i32, i32) {
    %c0_i32 = arith.constant 0 : i32
    %c0_i32_0 = arith.constant 0 : i32
    return %arg0, %c0_i32 : i32, i32
  }
  func.func @transform_5(%arg0: i32) -> (i32, i32) {
    %c0_i32 = arith.constant 0 : i32
    %c0_i32_0 = arith.constant 0 : i32
    return %arg0, %c0_i32 : i32, i32
  }
}

</mosaic_0001>

<llo_original>
// kernel: gat_net_forward.2
$region0: #{gat_net_forward.2}
  #allocation0 [shape = 'u32[]', space=smem, size = 0x4, offset = 0x4, fixed_abs, tag = 'smem constant byte address 0x4 - core index']
  #allocation1 [shape = 'u32[144,128]{1,0:T(1,128)}', space=vmem, size = 0x12000, scoped, tag = 'internal scratch']
  %s0 = inlined_call_operand.vmem [shape: f32[256,1], index: 0, kind: input, shape index: {}]
  %s1 = inlined_call_operand.vmem [shape: f32[1,256], index: 1, kind: input, shape index: {}]
  %s2 = inlined_call_operand.vmem [shape: bf16[256,128], index: 2, kind: input, shape index: {}]
  %s3 = inlined_call_operand.vmem [shape: f32[1,128], index: 3, kind: input, shape index: {}]
  %s4 = inlined_call_operand.vmem [shape: bf16[256,256], index: 4, kind: input, shape index: {}]
  %s5 = inlined_call_operand.vmem [shape: bf16[256,128], index: 5, kind: output, shape index: {}]
  %s6 = sld [smem:[#allocation0]]
  $region53: #{gat_net_forward.2} parent=0
    _
  %s8 = ssub.s32 1, %s6
  %s9 = scalar_select 0, %s8, %s6
  loop: start=0, step=1, limit=4
  $region2: #{gat_net_forward.2} parent=0 // loop_pre_header
    _
  $region3: #{gat_net_forward.2} parent=0 // loop_header
    %s11 = sphi 0, %s15
    %p12 = scmp.ge.s32.totalorder %s11, 4
    %s21 = sphi 0, %s23
    %s24 = sphi 0, %s21
    %s25 = sphi 0, %s24
    %s41 = sphi 0, %s25
    %s45 = sphi 0, %s45
    %s47 = sphi 0, %s45
    %s48 = sphi 0, %s47
    %s62 = sphi 0, %s48
    %s66 = sphi 0, %s66
    %s68 = sphi 0, %s66
    %s69 = sphi 0, %s68
    %s83 = sphi 0, %s69
    %s87 = sphi 0, %s87
    %s89 = sphi 0, %s87
    %s90 = sphi 0, %s89
    %s104 = sphi 0, %s90
    %s110 = sphi 0, %s112
    %s113 = sphi 0, %s110
    %s114 = sphi 0, %s113
    %s130 = sphi 0, %s114
    %s136 = sphi 0, %s138
    %s139 = sphi 0, %s136
    %s140 = sphi 0, %s139
    %s156 = sphi 0, %s140
  $region4: #{gat_net_forward.2} parent=0 // loop_header_branch
    %14 = sbr.rel (%p12) target = $region8
  $region5: #{gat_net_forward.2} parent=0 // loop_body
    %s16 = ssub.s32 %s11, 1
    %s17 = ssub.s32 %s11, 2
    %s18 = sadd.s32 %s11, 1
    %s19 = ssub.s32 %s11, %s18
    %p20 = scmp.eq.s32.totalorder %s19, 0
    %s22 = sadd.s32 %s21, 1
    %s23 = scalar_select %p20, %s21, %s22
    %p26 = pneg %p20
    %p27 = scmp.eq.s32.totalorder %s11, 1
    %p28 = por %p26, %p27
    %p29 = scmp.ne.s32.totalorder %s21, %s24
    %p30 = scmp.eq.s32.totalorder %s11, 0
    %p31 = por %p29, %p30
    %p32 = scmp.ne.s32.totalorder %s21, %s24
    %p33 = scmp.eq.s32.totalorder %s16, 1
    %p34 = por %p32, %p33
    %p35 = scmp.ne.s32.totalorder %s24, %s25
    %p36 = scmp.eq.s32.totalorder %s16, 0
    %p37 = por %p35, %p36
    %p38 = scmp.ne.s32.totalorder %s24, %s25
    %p39 = scmp.eq.s32.totalorder %s17, 1
    %p40 = por %p38, %p39
    %p42 = scmp.ne.s32.totalorder %s25, %s41
    %p43 = scmp.eq.s32.totalorder %s17, 0
    %p44 = por %p42, %p43
    %s46 = sadd.s32 %s45, 1
    %p49 = scmp.eq.s32.totalorder %s11, 1
    %p50 = scmp.ne.s32.totalorder %s45, %s47
    %p51 = scmp.eq.s32.totalorder %s11, 0
    %p52 = por %p50, %p51
    %p53 = scmp.ne.s32.totalorder %s45, %s47
    %p54 = scmp.eq.s32.totalorder %s16, 1
    %p55 = por %p53, %p54
    %p56 = scmp.ne.s32.totalorder %s47, %s48
    %p57 = scmp.eq.s32.totalorder %s16, 0
    %p58 = por %p56, %p57
    %p59 = scmp.ne.s32.totalorder %s47, %s48
    %p60 = scmp.eq.s32.totalorder %s17, 1
    %p61 = por %p59, %p60
    %p63 = scmp.ne.s32.totalorder %s48, %s62
    %p64 = scmp.eq.s32.totalorder %s17, 0
    %p65 = por %p63, %p64
    %s67 = sadd.s32 %s66, 1
    %p70 = scmp.eq.s32.totalorder %s11, 1
    %p71 = scmp.ne.s32.totalorder %s66, %s68
    %p72 = scmp.eq.s32.totalorder %s11, 0
    %p73 = por %p71, %p72
    %p74 = scmp.ne.s32.totalorder %s66, %s68
    %p75 = scmp.eq.s32.totalorder %s16, 1
    %p76 = por %p74, %p75
    %p77 = scmp.ne.s32.totalorder %s68, %s69
    %p78 = scmp.eq.s32.totalorder %s16, 0
    %p79 = por %p77, %p78
    %p80 = scmp.ne.s32.totalorder %s68, %s69
    %p81 = scmp.eq.s32.totalorder %s17, 1
    %p82 = por %p80, %p81
    %p84 = scmp.ne.s32.totalorder %s69, %s83
    %p85 = scmp.eq.s32.totalorder %s17, 0
    %p86 = por %p84, %p85
    %s88 = sadd.s32 %s87, 1
    %p91 = scmp.eq.s32.totalorder %s11, 1
    %p92 = scmp.ne.s32.totalorder %s87, %s89
    %p93 = scmp.eq.s32.totalorder %s11, 0
    %p94 = por %p92, %p93
    %p95 = scmp.ne.s32.totalorder %s87, %s89
    %p96 = scmp.eq.s32.totalorder %s16, 1
    %p97 = por %p95, %p96
    %p98 = scmp.ne.s32.totalorder %s89, %s90
    %p99 = scmp.eq.s32.totalorder %s16, 0
    %p100 = por %p98, %p99
    %p101 = scmp.ne.s32.totalorder %s89, %s90
    %p102 = scmp.eq.s32.totalorder %s17, 1
    %p103 = por %p101, %p102
    %p105 = scmp.ne.s32.totalorder %s90, %s104
    %p106 = scmp.eq.s32.totalorder %s17, 0
    %p107 = por %p105, %p106
    %s108 = ssub.s32 %s11, %s18
    %p109 = scmp.eq.s32.totalorder %s108, 0
    %s111 = sadd.s32 %s110, 1
    %s112 = scalar_select %p109, %s110, %s111
    %p115 = pneg %p109
    %p116 = scmp.eq.s32.totalorder %s11, 1
    %p117 = por %p115, %p116
    %p118 = scmp.ne.s32.totalorder %s110, %s113
    %p119 = scmp.eq.s32.totalorder %s11, 0
    %p120 = por %p118, %p119
    %p121 = scmp.ne.s32.totalorder %s110, %s113
    %p122 = scmp.eq.s32.totalorder %s16, 1
    %p123 = por %p121, %p122
    %p124 = scmp.ne.s32.totalorder %s113, %s114
    %p125 = scmp.eq.s32.totalorder %s16, 0
    %p126 = por %p124, %p125
    %p127 = scmp.ne.s32.totalorder %s113, %s114
    %p128 = scmp.eq.s32.totalorder %s17, 1
    %p129 = por %p127, %p128
    %p131 = scmp.ne.s32.totalorder %s114, %s130
    %p132 = scmp.eq.s32.totalorder %s17, 0
    %p133 = por %p131, %p132
    %s134 = ssub.s32 %s11, %s18
    %p135 = scmp.eq.s32.totalorder %s134, 0
    %s137 = sadd.s32 %s136, 1
    %s138 = scalar_select %p135, %s136, %s137
    %p141 = pneg %p135
    %p142 = scmp.eq.s32.totalorder %s11, 1
    %p143 = por %p141, %p142
    %p144 = scmp.ne.s32.totalorder %s136, %s139
    %p145 = scmp.eq.s32.totalorder %s11, 0
    %p146 = por %p144, %p145
    %p147 = scmp.ne.s32.totalorder %s136, %s139
    %p148 = scmp.eq.s32.totalorder %s16, 1
    %p149 = por %p147, %p148
    %p150 = scmp.ne.s32.totalorder %s139, %s140
    %p151 = scmp.eq.s32.totalorder %s16, 0
    %p152 = por %p150, %p151
    %p153 = scmp.ne.s32.totalorder %s139, %s140
    %p154 = scmp.eq.s32.totalorder %s17, 1
    %p155 = por %p153, %p154
    %p157 = scmp.ne.s32.totalorder %s140, %s156
    %p158 = scmp.eq.s32.totalorder %s17, 0
    %p159 = por %p157, %p158
    %p160 = scmp.le.s32.totalorder 1, %s11
    %p161 = scmp.lt.s32.totalorder %s11, 3
    %p162 = pnand %p160, %p161
    %p163 = pneg %p162
    // Predicated region
    $region9: #{gat_net_forward.2} parent=5 // pred_check
      _
    $region10: #{gat_net_forward.2} parent=5 // pred_check_branch
      %165 = sbr.rel (%p162) target = $region12
    $region11: #{gat_net_forward.2} parent=5 // pred_region
      %s166 = ssub.s32 %s11, 1
      // Predicated region
      $region13: #{gat_net_forward.2} parent=11 // pred_check
        %p167 = pneg %p58
      $region14: #{gat_net_forward.2} parent=11 // pred_check_branch
        %169 = sbr.rel (%p167) target = $region16
      $region15: #{gat_net_forward.2} parent=11 // pred_region
        _
      $region16: #{gat_net_forward.2} parent=11 // pred_fallthru
        _
      // Predicated region
      $region17: #{gat_net_forward.2} parent=11 // pred_check
        %p170 = pneg %p79
      $region18: #{gat_net_forward.2} parent=11 // pred_check_branch
        %172 = sbr.rel (%p170) target = $region20
      $region19: #{gat_net_forward.2} parent=11 // pred_region
        _
      $region20: #{gat_net_forward.2} parent=11 // pred_fallthru
        _
      // Predicated region
      $region21: #{gat_net_forward.2} parent=11 // pred_check
        %p173 = pneg %p100
      $region22: #{gat_net_forward.2} parent=11 // pred_check_branch
        %175 = sbr.rel (%p173) target = $region24
      $region23: #{gat_net_forward.2} parent=11 // pred_region
        _
      $region24: #{gat_net_forward.2} parent=11 // pred_fallthru
        _
    $region12: #{gat_net_forward.2} parent=5 // pred_fallthru
      _
    %p176 = scmp.lt.s32.totalorder %s11, 2
    // Predicated region
    $region25: #{gat_net_forward.2} parent=5 // pred_check
      %p177 = pneg %p176
    $region26: #{gat_net_forward.2} parent=5 // pred_check_branch
      %179 = sbr.rel (%p177) target = $region28
    $region27: #{gat_net_forward.2} parent=5 // pred_region
      // Predicated region
      $region29: #{gat_net_forward.2} parent=27 // pred_check
        %p180 = pneg %p31
      $region30: #{gat_net_forward.2} parent=27 // pred_check_branch
        %182 = sbr.rel (%p180) target = $region32
      $region31: #{gat_net_forward.2} parent=27 // pred_region
        %s183 = smul.u32 16, %s11
        %p184 = scmp.lt.s32.totalorder %s183, 31
        %s185 = scalar_select %p184, %s183, 31
        %s186 = smul.addr %s185, 8
        %s187 = scalar_lea.vmem %s0, %s186
        %s188 = smul.u32 16, %s11
      $region32: #{gat_net_forward.2} parent=27 // pred_fallthru
        _
      // Predicated region
      $region33: #{gat_net_forward.2} parent=27 // pred_check
        %p189 = pneg %p120
      $region34: #{gat_net_forward.2} parent=27 // pred_check_branch
        %191 = sbr.rel (%p189) target = $region36
      $region35: #{gat_net_forward.2} parent=27 // pred_region
        %s192 = smul.u32 16, %s11
        %p193 = scmp.lt.s32.totalorder %s192, 31
        %s194 = scalar_select %p193, %s192, 31
        %s195 = smul.addr %s194, 2
        %s196 = smul.addr %s195, 4
        %s197 = scalar_lea.vmem %s4, %s196
        %s198 = smul.u32 16, %s11
      $region36: #{gat_net_forward.2} parent=27 // pred_fallthru
        _
    $region28: #{gat_net_forward.2} parent=5 // pred_fallthru
      _
    %p199 = scmp.le.s32.totalorder 1, %s11
    %p200 = scmp.lt.s32.totalorder %s11, 3
    %p201 = pnand %p199, %p200
    %p202 = pneg %p201
    // Predicated region
    $region37: #{gat_net_forward.2} parent=5 // pred_check
      _
    $region38: #{gat_net_forward.2} parent=5 // pred_check_branch
      %204 = sbr.rel (%p201) target = $region40
    $region39: #{gat_net_forward.2} parent=5 // pred_region
      %s205 = ssub.s32 %s11, 1
      %s206 = smul.u32 16, %s16
      %p207 = scmp.lt.s32.totalorder %s206, 31
      %s208 = scalar_select %p207, %s206, 31
      %s209 = smul.addr %s208, 8
      %s210 = scalar_lea.vmem %s0, %s209
      %p211 = pneg %p37
      %p212 = pneg %p34
      %p213 = pneg %p58
      %p214 = pneg %p55
      %p215 = pneg %p79
      %p216 = pneg %p76
      %p217 = pneg %p100
      %p218 = pneg %p97
      %s219 = smul.u32 16, %s16
      %p220 = scmp.lt.s32.totalorder %s219, 31
      %s221 = scalar_select %p220, %s219, 31
      %s222 = smul.addr %s221, 2
      %s223 = smul.addr %s222, 4
      %s224 = scalar_lea.vmem %s4, %s223
      %p225 = pneg %p126
      %p226 = pneg %p123
      %p227 = pneg %p152
      %p228 = pneg %p149
      %s229 = smul.u32 16, %s16
      %p230 = scmp.lt.s32.totalorder %s229, 31
      %s231 = scalar_select %p230, %s229, 31
      %s232 = smul.addr %s231, 4
      %s233 = scalar_lea.vmem %s5, %s232
      %s234 = smul.u32 16, %s16
      %p235 = scmp.lt.s32.totalorder %s234, 31
      %s236 = scalar_select %p235, %s234, 31
      %s237 = smul.addr %s236, 8
      %s238 = scalar_lea.vmem %s0, %s237
      %s239 = smul.u32 16, %s16
      %s240 = smul.u32 16, %s16
      %p241 = scmp.lt.s32.totalorder %s240, 31
      %s242 = scalar_select %p241, %s240, 31
      %s243 = smul.addr %s242, 2
      %s244 = smul.addr %s243, 4
      %s245 = scalar_lea.vmem %s4, %s244
      %s246 = smul.u32 16, %s16
      %s247 = smul.u32 16, %s16
      %p248 = scmp.lt.s32.totalorder %s247, 31
      %s249 = scalar_select %p248, %s247, 31
      %s250 = smul.addr %s249, 4
      %s251 = scalar_lea.vmem %s5, %s250
      %s252 = smul.u32 16, %s16
      %v254 = vld [vmem:[%s238] sm:$0xff]
      %v255 = vld [vmem:[%s238 + $0x8] sm:$0xff]
      %v256 = vld [vmem:[%s238 + $0x10] sm:$0xff]
      %v257 = vld [vmem:[%s238 + $0x18] sm:$0xff]
      %v258 = vld [vmem:[%s238 + $0x20] sm:$0xff]
      %v259 = vld [vmem:[%s238 + $0x28] sm:$0xff]
      %v260 = vld [vmem:[%s238 + $0x30] sm:$0xff]
      %v261 = vld [vmem:[%s238 + $0x38] sm:$0xff]
      %v262 = vld [vmem:[%s238 + $0x40] sm:$0xff]
      %v263 = vld [vmem:[%s238 + $0x48] sm:$0xff]
      %v264 = vld [vmem:[%s238 + $0x50] sm:$0xff]
      %v265 = vld [vmem:[%s238 + $0x58] sm:$0xff]
      %v266 = vld [vmem:[%s238 + $0x60] sm:$0xff]
      %v267 = vld [vmem:[%s238 + $0x68] sm:$0xff]
      %v268 = vld [vmem:[%s238 + $0x70] sm:$0xff]
      %v269 = vld [vmem:[%s238 + $0x78] sm:$0xff]
      %v270 = vld [vmem:[%s1] sm:$0x3]
      %272 = vset.pattern.permute.xlu0 0
      %273 = vperm.xlu0 %272, %v254
      %v274 = vpop.permute.xlu0 %273
      %277 = vset.pattern.permute.xlu0 0
      %278 = vperm.xlu0 %277, %v255
      %v279 = vpop.permute.xlu0 %278
      %282 = vset.pattern.permute.xlu0 0
      %283 = vperm.xlu0 %282, %v256
      %v284 = vpop.permute.xlu0 %283
      %287 = vset.pattern.permute.xlu0 0
      %288 = vperm.xlu0 %287, %v257
      %v289 = vpop.permute.xlu0 %288
      %292 = vset.pattern.permute.xlu0 0
      %293 = vperm.xlu0 %292, %v258
      %v294 = vpop.permute.xlu0 %293
      %297 = vset.pattern.permute.xlu0 0
      %298 = vperm.xlu0 %297, %v259
      %v299 = vpop.permute.xlu0 %298
      %302 = vset.pattern.permute.xlu0 0
      %303 = vperm.xlu0 %302, %v260
      %v304 = vpop.permute.xlu0 %303
      %307 = vset.pattern.permute.xlu0 0
      %308 = vperm.xlu0 %307, %v261
      %v309 = vpop.permute.xlu0 %308
      %312 = vset.pattern.permute.xlu0 0
      %313 = vperm.xlu0 %312, %v262
      %v314 = vpop.permute.xlu0 %313
      %317 = vset.pattern.permute.xlu0 0
      %318 = vperm.xlu0 %317, %v263
      %v319 = vpop.permute.xlu0 %318
      %322 = vset.pattern.permute.xlu0 0
      %323 = vperm.xlu0 %322, %v264
      %v324 = vpop.permute.xlu0 %323
      %327 = vset.pattern.permute.xlu0 0
      %328 = vperm.xlu0 %327, %v265
      %v329 = vpop.permute.xlu0 %328
      %332 = vset.pattern.permute.xlu0 0
      %333 = vperm.xlu0 %332, %v266
      %v334 = vpop.permute.xlu0 %333
      %337 = vset.pattern.permute.xlu0 0
      %338 = vperm.xlu0 %337, %v267
      %v339 = vpop.permute.xlu0 %338
      %342 = vset.pattern.permute.xlu0 0
      %343 = vperm.xlu0 %342, %v268
      %v344 = vpop.permute.xlu0 %343
      %347 = vset.pattern.permute.xlu0 0
      %348 = vperm.xlu0 %347, %v269
      %v349 = vpop.permute.xlu0 %348
      %v352 = vlaneseq
      %v353 = vshrl.u32 %v352, 7
      %v354 = vsub.s32 0, %v353
      %v355 = vrot.slane %v270, %v354
      %v356 = vlaneseq
      %v357 = vshrl.u32 %v356, 7
      %v358 = vsub.s32 1, %v357
      %v359 = vrot.slane %v270, %v358
      %v362 = vadd.f32 %v274, %v355
      %v363 = vadd.f32 %v274, %v359
      %v364 = vadd.f32 %v279, %v355
      %v365 = vadd.f32 %v279, %v359
      %v366 = vadd.f32 %v284, %v355
      %v367 = vadd.f32 %v284, %v359
      %v368 = vadd.f32 %v289, %v355
      %v369 = vadd.f32 %v289, %v359
      %v370 = vadd.f32 %v294, %v355
      %v371 = vadd.f32 %v294, %v359
      %v372 = vadd.f32 %v299, %v355
      %v373 = vadd.f32 %v299, %v359
      %v374 = vadd.f32 %v304, %v355
      %v375 = vadd.f32 %v304, %v359
      %v376 = vadd.f32 %v309, %v355
      %v377 = vadd.f32 %v309, %v359
      %v378 = vadd.f32 %v314, %v355
      %v379 = vadd.f32 %v314, %v359
      %v380 = vadd.f32 %v319, %v355
      %v381 = vadd.f32 %v319, %v359
      %v382 = vadd.f32 %v324, %v355
      %v383 = vadd.f32 %v324, %v359
      %v384 = vadd.f32 %v329, %v355
      %v385 = vadd.f32 %v329, %v359
      %v386 = vadd.f32 %v334, %v355
      %v387 = vadd.f32 %v334, %v359
      %v388 = vadd.f32 %v339, %v355
      %v389 = vadd.f32 %v339, %v359
      %v390 = vadd.f32 %v344, %v355
      %v391 = vadd.f32 %v344, %v359
      %v392 = vadd.f32 %v349, %v355
      %v393 = vadd.f32 %v349, %v359
      %v394 = vmul.f32 %v362, 0.2
      %v395 = vmul.f32 %v363, 0.2
      %v396 = vmul.f32 %v364, 0.2
      %v397 = vmul.f32 %v365, 0.2
      %v398 = vmul.f32 %v366, 0.2
      %v399 = vmul.f32 %v367, 0.2
      %v400 = vmul.f32 %v368, 0.2
      %v401 = vmul.f32 %v369, 0.2
      %v402 = vmul.f32 %v370, 0.2
      %v403 = vmul.f32 %v371, 0.2
      %v404 = vmul.f32 %v372, 0.2
      %v405 = vmul.f32 %v373, 0.2
      %v406 = vmul.f32 %v374, 0.2
      %v407 = vmul.f32 %v375, 0.2
      %v408 = vmul.f32 %v376, 0.2
      %v409 = vmul.f32 %v377, 0.2
      %v410 = vmul.f32 %v378, 0.2
      %v411 = vmul.f32 %v379, 0.2
      %v412 = vmul.f32 %v380, 0.2
      %v413 = vmul.f32 %v381, 0.2
      %v414 = vmul.f32 %v382, 0.2
      %v415 = vmul.f32 %v383, 0.2
      %v416 = vmul.f32 %v384, 0.2
      %v417 = vmul.f32 %v385, 0.2
      %v418 = vmul.f32 %v386, 0.2
      %v419 = vmul.f32 %v387, 0.2
      %v420 = vmul.f32 %v388, 0.2
      %v421 = vmul.f32 %v389, 0.2
      %v422 = vmul.f32 %v390, 0.2
      %v423 = vmul.f32 %v391, 0.2
      %v424 = vmul.f32 %v392, 0.2
      %v425 = vmul.f32 %v393, 0.2
      %v426 = vmax.f32 %v362, %v394
      %v427 = vmax.f32 %v363, %v395
      %v428 = vmax.f32 %v364, %v396
      %v429 = vmax.f32 %v365, %v397
      %v430 = vmax.f32 %v366, %v398
      %v431 = vmax.f32 %v367, %v399
      %v432 = vmax.f32 %v368, %v400
      %v433 = vmax.f32 %v369, %v401
      %v434 = vmax.f32 %v370, %v402
      %v435 = vmax.f32 %v371, %v403
      %v436 = vmax.f32 %v372, %v404
      %v437 = vmax.f32 %v373, %v405
      %v438 = vmax.f32 %v374, %v406
      %v439 = vmax.f32 %v375, %v407
      %v440 = vmax.f32 %v376, %v408
      %v441 = vmax.f32 %v377, %v409
      %v442 = vmax.f32 %v378, %v410
      %v443 = vmax.f32 %v379, %v411
      %v444 = vmax.f32 %v380, %v412
      %v445 = vmax.f32 %v381, %v413
      %v446 = vmax.f32 %v382, %v414
      %v447 = vmax.f32 %v383, %v415
      %v448 = vmax.f32 %v384, %v416
      %v449 = vmax.f32 %v385, %v417
      %v450 = vmax.f32 %v386, %v418
      %v451 = vmax.f32 %v387, %v419
      %v452 = vmax.f32 %v388, %v420
      %v453 = vmax.f32 %v389, %v421
      %v454 = vmax.f32 %v390, %v422
      %v455 = vmax.f32 %v391, %v423
      %v456 = vmax.f32 %v392, %v424
      %v457 = vmax.f32 %v393, %v425
      %v458 = vld [vmem:[%s245] sm:$0xff]
      %v459 = vld [vmem:[%s245 + $0x8] sm:$0xff]
      %v460 = vld [vmem:[%s245 + $0x10] sm:$0xff]
      %v461 = vld [vmem:[%s245 + $0x18] sm:$0xff]
      %v462 = vld [vmem:[%s245 + $0x20] sm:$0xff]
      %v463 = vld [vmem:[%s245 + $0x28] sm:$0xff]
      %v464 = vld [vmem:[%s245 + $0x30] sm:$0xff]
      %v465 = vld [vmem:[%s245 + $0x38] sm:$0xff]
      %v466 = vld [vmem:[%s245 + $0x40] sm:$0xff]
      %v467 = vld [vmem:[%s245 + $0x48] sm:$0xff]
      %v468 = vld [vmem:[%s245 + $0x50] sm:$0xff]
      %v469 = vld [vmem:[%s245 + $0x58] sm:$0xff]
      %v470 = vld [vmem:[%s245 + $0x60] sm:$0xff]
      %v471 = vld [vmem:[%s245 + $0x68] sm:$0xff]
      %v472 = vld [vmem:[%s245 + $0x70] sm:$0xff]
      %v473 = vld [vmem:[%s245 + $0x78] sm:$0xff]
      %v474 = vunpack.c.l.bf16 %v458
      %v475 = vunpack.c.h.bf16 %v458
      %v476 = vunpack.c.l.bf16 %v459
      %v477 = vunpack.c.h.bf16 %v459
      %v478 = vunpack.c.l.bf16 %v460
      %v479 = vunpack.c.h.bf16 %v460
      %v480 = vunpack.c.l.bf16 %v461
      %v481 = vunpack.c.h.bf16 %v461
      %v482 = vunpack.c.l.bf16 %v462
      %v483 = vunpack.c.h.bf16 %v462
      %v484 = vunpack.c.l.bf16 %v463
      %v485 = vunpack.c.h.bf16 %v463
      %v486 = vunpack.c.l.bf16 %v464
      %v487 = vunpack.c.h.bf16 %v464
      %v488 = vunpack.c.l.bf16 %v465
      %v489 = vunpack.c.h.bf16 %v465
      %v490 = vunpack.c.l.bf16 %v466
      %v491 = vunpack.c.h.bf16 %v466
      %v492 = vunpack.c.l.bf16 %v467
      %v493 = vunpack.c.h.bf16 %v467
      %v494 = vunpack.c.l.bf16 %v468
      %v495 = vunpack.c.h.bf16 %v468
      %v496 = vunpack.c.l.bf16 %v469
      %v497 = vunpack.c.h.bf16 %v469
      %v498 = vunpack.c.l.bf16 %v470
      %v499 = vunpack.c.h.bf16 %v470
      %v500 = vunpack.c.l.bf16 %v471
      %v501 = vunpack.c.h.bf16 %v471
      %v502 = vunpack.c.l.bf16 %v472
      %v503 = vunpack.c.h.bf16 %v472
      %v504 = vunpack.c.l.bf16 %v473
      %v505 = vunpack.c.h.bf16 %v473
      %v506 = vadd.f32 %v426, %v474
      %v507 = vadd.f32 %v427, %v475
      %v508 = vadd.f32 %v428, %v476
      %v509 = vadd.f32 %v429, %v477
      %v510 = vadd.f32 %v430, %v478
      %v511 = vadd.f32 %v431, %v479
      %v512 = vadd.f32 %v432, %v480
      %v513 = vadd.f32 %v433, %v481
      %v514 = vadd.f32 %v434, %v482
      %v515 = vadd.f32 %v435, %v483
      %v516 = vadd.f32 %v436, %v484
      %v517 = vadd.f32 %v437, %v485
      %v518 = vadd.f32 %v438, %v486
      %v519 = vadd.f32 %v439, %v487
      %v520 = vadd.f32 %v440, %v488
      %v521 = vadd.f32 %v441, %v489
      %v522 = vadd.f32 %v442, %v490
      %v523 = vadd.f32 %v443, %v491
      %v524 = vadd.f32 %v444, %v492
      %v525 = vadd.f32 %v445, %v493
      %v526 = vadd.f32 %v446, %v494
      %v527 = vadd.f32 %v447, %v495
      %v528 = vadd.f32 %v448, %v496
      %v529 = vadd.f32 %v449, %v497
      %v530 = vadd.f32 %v450, %v498
      %v531 = vadd.f32 %v451, %v499
      %v532 = vadd.f32 %v452, %v500
      %v533 = vadd.f32 %v453, %v501
      %v534 = vadd.f32 %v454, %v502
      %v535 = vadd.f32 %v455, %v503
      %v536 = vadd.f32 %v456, %v504
      %v537 = vadd.f32 %v457, %v505
      %v538 = vmax.f32 %v506, %v507
      %539 = vmax.xlane.f32.xlu0 %v538
      %v540 = vpop.xlane.xlu0 %539
      %v541 = vmax.f32 %v508, %v509
      %542 = vmax.xlane.f32.xlu0 %v541
      %v543 = vpop.xlane.xlu0 %542
      %v544 = vmax.f32 %v510, %v511
      %545 = vmax.xlane.f32.xlu0 %v544
      %v546 = vpop.xlane.xlu0 %545
      %v547 = vmax.f32 %v512, %v513
      %548 = vmax.xlane.f32.xlu0 %v547
      %v549 = vpop.xlane.xlu0 %548
      %v550 = vmax.f32 %v514, %v515
      %551 = vmax.xlane.f32.xlu0 %v550
      %v552 = vpop.xlane.xlu0 %551
      %v553 = vmax.f32 %v516, %v517
      %554 = vmax.xlane.f32.xlu0 %v553
      %v555 = vpop.xlane.xlu0 %554
      %v556 = vmax.f32 %v518, %v519
      %557 = vmax.xlane.f32.xlu0 %v556
      %v558 = vpop.xlane.xlu0 %557
      %v559 = vmax.f32 %v520, %v521
      %560 = vmax.xlane.f32.xlu0 %v559
      %v561 = vpop.xlane.xlu0 %560
      %v562 = vmax.f32 %v522, %v523
      %563 = vmax.xlane.f32.xlu0 %v562
      %v564 = vpop.xlane.xlu0 %563
      %v565 = vmax.f32 %v524, %v525
      %566 = vmax.xlane.f32.xlu0 %v565
      %v567 = vpop.xlane.xlu0 %566
      %v568 = vmax.f32 %v526, %v527
      %569 = vmax.xlane.f32.xlu0 %v568
      %v570 = vpop.xlane.xlu0 %569
      %v571 = vmax.f32 %v528, %v529
      %572 = vmax.xlane.f32.xlu0 %v571
      %v573 = vpop.xlane.xlu0 %572
      %v574 = vmax.f32 %v530, %v531
      %575 = vmax.xlane.f32.xlu0 %v574
      %v576 = vpop.xlane.xlu0 %575
      %v577 = vmax.f32 %v532, %v533
      %578 = vmax.xlane.f32.xlu0 %v577
      %v579 = vpop.xlane.xlu0 %578
      %v580 = vmax.f32 %v534, %v535
      %581 = vmax.xlane.f32.xlu0 %v580
      %v582 = vpop.xlane.xlu0 %581
      %v583 = vmax.f32 %v536, %v537
      %584 = vmax.xlane.f32.xlu0 %v583
      %v585 = vpop.xlane.xlu0 %584
      %v586 = vsub.f32 %v506, %v540
      %v587 = vsub.f32 %v507, %v540
      %v588 = vsub.f32 %v508, %v543
      %v589 = vsub.f32 %v509, %v543
      %v590 = vsub.f32 %v510, %v546
      %v591 = vsub.f32 %v511, %v546
      %v592 = vsub.f32 %v512, %v549
      %v593 = vsub.f32 %v513, %v549
      %v594 = vsub.f32 %v514, %v552
      %v595 = vsub.f32 %v515, %v552
      %v596 = vsub.f32 %v516, %v555
      %v597 = vsub.f32 %v517, %v555
      %v598 = vsub.f32 %v518, %v558
      %v599 = vsub.f32 %v519, %v558
      %v600 = vsub.f32 %v520, %v561
      %v601 = vsub.f32 %v521, %v561
      %v602 = vsub.f32 %v522, %v564
      %v603 = vsub.f32 %v523, %v564
      %v604 = vsub.f32 %v524, %v567
      %v605 = vsub.f32 %v525, %v567
      %v606 = vsub.f32 %v526, %v570
      %v607 = vsub.f32 %v527, %v570
      %v608 = vsub.f32 %v528, %v573
      %v609 = vsub.f32 %v529, %v573
      %v610 = vsub.f32 %v530, %v576
      %v611 = vsub.f32 %v531, %v576
      %v612 = vsub.f32 %v532, %v579
      %v613 = vsub.f32 %v533, %v579
      %v614 = vsub.f32 %v534, %v582
      %v615 = vsub.f32 %v535, %v582
      %v616 = vsub.f32 %v536, %v585
      %v617 = vsub.f32 %v537, %v585
      %v618 = vmul.f32 %v586, 1.442695
      %v619 = vpow.pop %v618
      %v620 = vmul.f32 %v587, 1.442695
      %v621 = vpow.pop %v620
      %v622 = vmul.f32 %v588, 1.442695
      %v623 = vpow.pop %v622
      %v624 = vmul.f32 %v589, 1.442695
      %v625 = vpow.pop %v624
      %v626 = vmul.f32 %v590, 1.442695
      %v627 = vpow.pop %v626
      %v628 = vmul.f32 %v591, 1.442695
      %v629 = vpow.pop %v628
      %v630 = vmul.f32 %v592, 1.442695
      %v631 = vpow.pop %v630
      %v632 = vmul.f32 %v593, 1.442695
      %v633 = vpow.pop %v632
      %v634 = vmul.f32 %v594, 1.442695
      %v635 = vpow.pop %v634
      %v636 = vmul.f32 %v595, 1.442695
      %v637 = vpow.pop %v636
      %v638 = vmul.f32 %v596, 1.442695
      %v639 = vpow.pop %v638
      %v640 = vmul.f32 %v597, 1.442695
      %v641 = vpow.pop %v640
      %v642 = vmul.f32 %v598, 1.442695
      %v643 = vpow.pop %v642
      %v644 = vmul.f32 %v599, 1.442695
      %v645 = vpow.pop %v644
      %v646 = vmul.f32 %v600, 1.442695
      %v647 = vpow.pop %v646
      %v648 = vmul.f32 %v601, 1.442695
      %v649 = vpow.pop %v648
      %v650 = vmul.f32 %v602, 1.442695
      %v651 = vpow.pop %v650
      %v652 = vmul.f32 %v603, 1.442695
      %v653 = vpow.pop %v652
      %v654 = vmul.f32 %v604, 1.442695
      %v655 = vpow.pop %v654
      %v656 = vmul.f32 %v605, 1.442695
      %v657 = vpow.pop %v656
      %v658 = vmul.f32 %v606, 1.442695
      %v659 = vpow.pop %v658
      %v660 = vmul.f32 %v607, 1.442695
      %v661 = vpow.pop %v660
      %v662 = vmul.f32 %v608, 1.442695
      %v663 = vpow.pop %v662
      %v664 = vmul.f32 %v609, 1.442695
      %v665 = vpow.pop %v664
      %v666 = vmul.f32 %v610, 1.442695
      %v667 = vpow.pop %v666
      %v668 = vmul.f32 %v611, 1.442695
      %v669 = vpow.pop %v668
      %v670 = vmul.f32 %v612, 1.442695
      %v671 = vpow.pop %v670
      %v672 = vmul.f32 %v613, 1.442695
      %v673 = vpow.pop %v672
      %v674 = vmul.f32 %v614, 1.442695
      %v675 = vpow.pop %v674
      %v676 = vmul.f32 %v615, 1.442695
      %v677 = vpow.pop %v676
      %v678 = vmul.f32 %v616, 1.442695
      %v679 = vpow.pop %v678
      %v680 = vmul.f32 %v617, 1.442695
      %v681 = vpow.pop %v680
      %v682 = vadd.f32 %v619, %v621
      %683 = vadd.xlane.f32.xlu0 %v682
      %v684 = vpop.xlane.xlu0 %683
      %v685 = vadd.f32 %v623, %v625
      %686 = vadd.xlane.f32.xlu0 %v685
      %v687 = vpop.xlane.xlu0 %686
      %v688 = vadd.f32 %v627, %v629
      %689 = vadd.xlane.f32.xlu0 %v688
      %v690 = vpop.xlane.xlu0 %689
      %v691 = vadd.f32 %v631, %v633
      %692 = vadd.xlane.f32.xlu0 %v691
      %v693 = vpop.xlane.xlu0 %692
      %v694 = vadd.f32 %v635, %v637
      %695 = vadd.xlane.f32.xlu0 %v694
      %v696 = vpop.xlane.xlu0 %695
      %v697 = vadd.f32 %v639, %v641
      %698 = vadd.xlane.f32.xlu0 %v697
      %v699 = vpop.xlane.xlu0 %698
      %v700 = vadd.f32 %v643, %v645
      %701 = vadd.xlane.f32.xlu0 %v700
      %v702 = vpop.xlane.xlu0 %701
      %v703 = vadd.f32 %v647, %v649
      %704 = vadd.xlane.f32.xlu0 %v703
      %v705 = vpop.xlane.xlu0 %704
      %v706 = vadd.f32 %v651, %v653
      %707 = vadd.xlane.f32.xlu0 %v706
      %v708 = vpop.xlane.xlu0 %707
      %v709 = vadd.f32 %v655, %v657
      %710 = vadd.xlane.f32.xlu0 %v709
      %v711 = vpop.xlane.xlu0 %710
      %v712 = vadd.f32 %v659, %v661
      %713 = vadd.xlane.f32.xlu0 %v712
      %v714 = vpop.xlane.xlu0 %713
      %v715 = vadd.f32 %v663, %v665
      %716 = vadd.xlane.f32.xlu0 %v715
      %v717 = vpop.xlane.xlu0 %716
      %v718 = vadd.f32 %v667, %v669
      %719 = vadd.xlane.f32.xlu0 %v718
      %v720 = vpop.xlane.xlu0 %719
      %v721 = vadd.f32 %v671, %v673
      %722 = vadd.xlane.f32.xlu0 %v721
      %v723 = vpop.xlane.xlu0 %722
      %v724 = vadd.f32 %v675, %v677
      %725 = vadd.xlane.f32.xlu0 %v724
      %v726 = vpop.xlane.xlu0 %725
      %v727 = vadd.f32 %v679, %v681
      %728 = vadd.xlane.f32.xlu0 %v727
      %v729 = vpop.xlane.xlu0 %728
      %v730 = vrcp.pop %v684
      %v731 = vrcp.pop %v687
      %v732 = vrcp.pop %v690
      %v733 = vrcp.pop %v693
      %v734 = vrcp.pop %v696
      %v735 = vrcp.pop %v699
      %v736 = vrcp.pop %v702
      %v737 = vrcp.pop %v705
      %v738 = vrcp.pop %v708
      %v739 = vrcp.pop %v711
      %v740 = vrcp.pop %v714
      %v741 = vrcp.pop %v717
      %v742 = vrcp.pop %v720
      %v743 = vrcp.pop %v723
      %v744 = vrcp.pop %v726
      %v745 = vrcp.pop %v729
      %v746 = vmul.f32 %v619, %v730
      %v747 = vmul.f32 %v621, %v730
      %v748 = vmul.f32 %v623, %v731
      %v749 = vmul.f32 %v625, %v731
      %v750 = vmul.f32 %v627, %v732
      %v751 = vmul.f32 %v629, %v732
      %v752 = vmul.f32 %v631, %v733
      %v753 = vmul.f32 %v633, %v733
      %v754 = vmul.f32 %v635, %v734
      %v755 = vmul.f32 %v637, %v734
      %v756 = vmul.f32 %v639, %v735
      %v757 = vmul.f32 %v641, %v735
      %v758 = vmul.f32 %v643, %v736
      %v759 = vmul.f32 %v645, %v736
      %v760 = vmul.f32 %v647, %v737
      %v761 = vmul.f32 %v649, %v737
      %v762 = vmul.f32 %v651, %v738
      %v763 = vmul.f32 %v653, %v738
      %v764 = vmul.f32 %v655, %v739
      %v765 = vmul.f32 %v657, %v739
      %v766 = vmul.f32 %v659, %v740
      %v767 = vmul.f32 %v661, %v740
      %v768 = vmul.f32 %v663, %v741
      %v769 = vmul.f32 %v665, %v741
      %v770 = vmul.f32 %v667, %v742
      %v771 = vmul.f32 %v669, %v742
      %v772 = vmul.f32 %v671, %v743
      %v773 = vmul.f32 %v673, %v743
      %v774 = vmul.f32 %v675, %v744
      %v775 = vmul.f32 %v677, %v744
      %v776 = vmul.f32 %v679, %v745
      %v777 = vmul.f32 %v681, %v745
      %v778 = vpack.c.bf16 %v748, %v746
      %v779 = vpack.c.bf16 %v749, %v747
      %v780 = vpack.c.bf16 %v752, %v750
      %v781 = vpack.c.bf16 %v753, %v751
      %v782 = vpack.c.bf16 %v756, %v754
      %v783 = vpack.c.bf16 %v757, %v755
      %v784 = vpack.c.bf16 %v760, %v758
      %v785 = vpack.c.bf16 %v761, %v759
      %v786 = vpack.c.bf16 %v764, %v762
      %v787 = vpack.c.bf16 %v765, %v763
      %v788 = vpack.c.bf16 %v768, %v766
      %v789 = vpack.c.bf16 %v769, %v767
      %v790 = vpack.c.bf16 %v772, %v770
      %v791 = vpack.c.bf16 %v773, %v771
      %v792 = vpack.c.bf16 %v776, %v774
      %v793 = vpack.c.bf16 %v777, %v775
      %v794 = vld [vmem:[%s2] sm:$0xf]
      %v795 = vld [vmem:[%s2 + $0x4] sm:$0xf]
      %v796 = vld [vmem:[%s2 + $0x8] sm:$0xf]
      %v797 = vld [vmem:[%s2 + $0xc] sm:$0xf]
      %v798 = vld [vmem:[%s2 + $0x10] sm:$0xf]
      %v799 = vld [vmem:[%s2 + $0x14] sm:$0xf]
      %v800 = vld [vmem:[%s2 + $0x18] sm:$0xf]
      %v801 = vld [vmem:[%s2 + $0x1c] sm:$0xf]
      %v802 = vld [vmem:[%s2 + $0x20] sm:$0xf]
      %v803 = vld [vmem:[%s2 + $0x24] sm:$0xf]
      %v804 = vld [vmem:[%s2 + $0x28] sm:$0xf]
      %v805 = vld [vmem:[%s2 + $0x2c] sm:$0xf]
      %v806 = vld [vmem:[%s2 + $0x30] sm:$0xf]
      %v807 = vld [vmem:[%s2 + $0x34] sm:$0xf]
      %v808 = vld [vmem:[%s2 + $0x38] sm:$0xf]
      %v809 = vld [vmem:[%s2 + $0x3c] sm:$0xf]
      %v810 = vld [vmem:[%s2 + $0x40] sm:$0xf]
      %v811 = vld [vmem:[%s2 + $0x44] sm:$0xf]
      %v812 = vld [vmem:[%s2 + $0x48] sm:$0xf]
      %v813 = vld [vmem:[%s2 + $0x4c] sm:$0xf]
      %v814 = vld [vmem:[%s2 + $0x50] sm:$0xf]
      %v815 = vld [vmem:[%s2 + $0x54] sm:$0xf]
      %v816 = vld [vmem:[%s2 + $0x58] sm:$0xf]
      %v817 = vld [vmem:[%s2 + $0x5c] sm:$0xf]
      %v818 = vld [vmem:[%s2 + $0x60] sm:$0xf]
      %v819 = vld [vmem:[%s2 + $0x64] sm:$0xf]
      %v820 = vld [vmem:[%s2 + $0x68] sm:$0xf]
      %v821 = vld [vmem:[%s2 + $0x6c] sm:$0xf]
      %v822 = vld [vmem:[%s2 + $0x70] sm:$0xf]
      %v823 = vld [vmem:[%s2 + $0x74] sm:$0xf]
      %v824 = vld [vmem:[%s2 + $0x78] sm:$0xf]
      %v825 = vld [vmem:[%s2 + $0x7c] sm:$0xf]
      %v826 = vld [vmem:[%s3] sm:$0x1]
      %v828 = vlaneseq
      %v829 = vshrl.u32 %v828, 7
      %v830 = vsub.s32 0, %v829
      %v831 = vrot.slane %v826, %v830
      %v865 = vunpack.c.l.b16 %v794
      %v866 = vunpack.c.l.b16 %v795
      %v867 = vunpack.c.l.b16 %v796
      %v868 = vunpack.c.l.b16 %v797
      %v869 = vunpack.c.l.b16 %v798
      %v870 = vunpack.c.l.b16 %v799
      %v871 = vunpack.c.l.b16 %v800
      %v872 = vunpack.c.l.b16 %v801
      %v873 = vunpack.c.l.b16 %v802
      %v874 = vunpack.c.l.b16 %v803
      %v875 = vunpack.c.l.b16 %v804
      %v876 = vunpack.c.l.b16 %v805
      %v877 = vunpack.c.l.b16 %v806
      %v878 = vunpack.c.l.b16 %v807
      %v879 = vunpack.c.l.b16 %v808
      %v880 = vunpack.c.l.b16 %v809
      %v881 = vunpack.c.l.b16 %v810
      %v882 = vunpack.c.l.b16 %v811
      %v883 = vunpack.c.l.b16 %v812
      %v884 = vunpack.c.l.b16 %v813
      %v885 = vunpack.c.l.b16 %v814
      %v886 = vunpack.c.l.b16 %v815
      %v887 = vunpack.c.l.b16 %v816
      %v888 = vunpack.c.l.b16 %v817
      %v889 = vunpack.c.l.b16 %v818
      %v890 = vunpack.c.l.b16 %v819
      %v891 = vunpack.c.l.b16 %v820
      %v892 = vunpack.c.l.b16 %v821
      %v893 = vunpack.c.l.b16 %v822
      %v894 = vunpack.c.l.b16 %v823
      %v895 = vunpack.c.l.b16 %v824
      %v896 = vunpack.c.l.b16 %v825
      %v897 = vpack.c.b16 %v866, %v865
      %v898 = vpack.c.b16 %v868, %v867
      %v899 = vpack.c.b16 %v870, %v869
      %v900 = vpack.c.b16 %v872, %v871
      %v901 = vpack.c.b16 %v874, %v873
      %v902 = vpack.c.b16 %v876, %v875
      %v903 = vpack.c.b16 %v878, %v877
      %v904 = vpack.c.b16 %v880, %v879
      %v905 = vpack.c.b16 %v882, %v881
      %v906 = vpack.c.b16 %v884, %v883
      %v907 = vpack.c.b16 %v886, %v885
      %v908 = vpack.c.b16 %v888, %v887
      %v909 = vpack.c.b16 %v890, %v889
      %v910 = vpack.c.b16 %v892, %v891
      %v911 = vpack.c.b16 %v894, %v893
      %v912 = vpack.c.b16 %v896, %v895
      %929 = vmatprep.subr.bf16.mxu0 0
      %930 = vmatpush1.bf16.msra.mxu0 %v904
      %931 = vmatprep.subr.bf16.mxu0 0
      %932 = vmatpush1.bf16.msra.mxu0 %v903
      %933 = vmatprep.subr.bf16.mxu0 0
      %934 = vmatpush1.bf16.msra.mxu0 %v902
      %935 = vmatprep.subr.bf16.mxu0 0
      %936 = vmatpush1.bf16.msra.mxu0 %v901
      %937 = vmatprep.subr.bf16.mxu0 0
      %938 = vmatpush1.bf16.msra.mxu0 %v900
      %939 = vmatprep.subr.bf16.mxu0 0
      %940 = vmatpush1.bf16.msra.mxu0 %v899
      %941 = vmatprep.subr.bf16.mxu0 0
      %942 = vmatpush1.bf16.msra.mxu0 %v898
      %943 = vmatprep.subr.bf16.mxu0 0
      %944 = vmatpush1.bf16.msra.mxu0 %v897
      %945 = vmatprep.subr.bf16.mxu0 0
      %946 = vmatpush2.bf16.msra.mxu0 %v912
      %947 = vmatprep.subr.bf16.mxu0 0
      %948 = vmatpush2.bf16.msra.mxu0 %v911
      %949 = vmatprep.subr.bf16.mxu0 0
      %950 = vmatpush2.bf16.msra.mxu0 %v910
      %951 = vmatprep.subr.bf16.mxu0 0
      %952 = vmatpush2.bf16.msra.mxu0 %v909
      %953 = vmatprep.subr.bf16.mxu0 0
      %954 = vmatpush2.bf16.msra.mxu0 %v908
      %955 = vmatprep.subr.bf16.mxu0 0
      %956 = vmatpush2.bf16.msra.mxu0 %v907
      %957 = vmatprep.subr.bf16.mxu0 0
      %958 = vmatpush2.bf16.msra.mxu0 %v906
      %959 = vmatprep.subr.bf16.mxu0 0
      %960 = vmatpush2.bf16.msra.mxu0 %v905
      %961 = vmatprep.mubr.bf16.mxu0 %v779
      %962 = vmatmul.mubr.bf16.gmra.mxu0 %v778
      %v963 = vpop.f32.mrf.mxu0
      %v964 = vadd.f32 %v831, %v963
      %v965 = vpop.f32.mrf.mxu0
      %v966 = vpop.f32.mrf.mxu0
      %v967 = vadd.f32 %v831, %v966
      %v968 = vpop.f32.mrf.mxu0
      %969 = vmatprep.mubr.bf16.mxu0 %v781
      %970 = vmatmul.mubr.bf16.gmra.mxu0 %v780
      %v971 = vpop.f32.mrf.mxu0
      %v972 = vadd.f32 %v831, %v971
      %v973 = vpop.f32.mrf.mxu0
      %v974 = vpop.f32.mrf.mxu0
      %v975 = vadd.f32 %v831, %v974
      %v976 = vpop.f32.mrf.mxu0
      %977 = vmatprep.mubr.bf16.mxu0 %v783
      %978 = vmatmul.mubr.bf16.gmra.mxu0 %v782
      %v979 = vpop.f32.mrf.mxu0
      %v980 = vadd.f32 %v831, %v979
      %v981 = vpop.f32.mrf.mxu0
      %v982 = vpop.f32.mrf.mxu0
      %v983 = vadd.f32 %v831, %v982
      %v984 = vpop.f32.mrf.mxu0
      %985 = vmatprep.mubr.bf16.mxu0 %v785
      %986 = vmatmul.mubr.bf16.gmra.mxu0 %v784
      %v987 = vpop.f32.mrf.mxu0
      %v988 = vadd.f32 %v831, %v987
      %v989 = vpop.f32.mrf.mxu0
      %v990 = vpop.f32.mrf.mxu0
      %v991 = vadd.f32 %v831, %v990
      %v992 = vpop.f32.mrf.mxu0
      %993 = vmatprep.mubr.bf16.mxu0 %v787
      %994 = vmatmul.mubr.bf16.gmra.mxu0 %v786
      %v995 = vpop.f32.mrf.mxu0
      %v996 = vadd.f32 %v831, %v995
      %v997 = vpop.f32.mrf.mxu0
      %v998 = vpop.f32.mrf.mxu0
      %v999 = vadd.f32 %v831, %v998
      %v1000 = vpop.f32.mrf.mxu0
      %1001 = vmatprep.mubr.bf16.mxu0 %v789
      %1002 = vmatmul.mubr.bf16.gmra.mxu0 %v788
      %v1003 = vpop.f32.mrf.mxu0
      %v1004 = vadd.f32 %v831, %v1003
      %v1005 = vpop.f32.mrf.mxu0
      %v1006 = vpop.f32.mrf.mxu0
      %v1007 = vadd.f32 %v831, %v1006
      %v1008 = vpop.f32.mrf.mxu0
      %1009 = vmatprep.mubr.bf16.mxu0 %v791
      %1010 = vmatmul.mubr.bf16.gmra.mxu0 %v790
      %v1011 = vpop.f32.mrf.mxu0
      %v1012 = vadd.f32 %v831, %v1011
      %v1013 = vpop.f32.mrf.mxu0
      %v1014 = vpop.f32.mrf.mxu0
      %v1015 = vadd.f32 %v831, %v1014
      %v1016 = vpop.f32.mrf.mxu0
      %1017 = vmatprep.mubr.bf16.mxu0 %v793
      %1018 = vmatmul.mubr.bf16.gmra.mxu0 %v792
      %v1019 = vpop.f32.mrf.mxu0
      %v1020 = vadd.f32 %v831, %v1019
      %v1021 = vpop.f32.mrf.mxu0
      %v1022 = vpop.f32.mrf.mxu0
      %v1023 = vadd.f32 %v831, %v1022
      %v1024 = vpop.f32.mrf.mxu0
      %1025 = vdwg.mxu0
      %v1026 = vmax.f32 %v964, 0.0
      %v1027 = vmax.f32 %v967, 0.0
      %v1028 = vmax.f32 %v972, 0.0
      %v1029 = vmax.f32 %v975, 0.0
      %v1030 = vmax.f32 %v980, 0.0
      %v1031 = vmax.f32 %v983, 0.0
      %v1032 = vmax.f32 %v988, 0.0
      %v1033 = vmax.f32 %v991, 0.0
      %v1034 = vmax.f32 %v996, 0.0
      %v1035 = vmax.f32 %v999, 0.0
      %v1036 = vmax.f32 %v1004, 0.0
      %v1037 = vmax.f32 %v1007, 0.0
      %v1038 = vmax.f32 %v1012, 0.0
      %v1039 = vmax.f32 %v1015, 0.0
      %v1040 = vmax.f32 %v1020, 0.0
      %v1041 = vmax.f32 %v1023, 0.0
      %v1042 = vpack.c.bf16 %v1027, %v1026
      %v1043 = vpack.c.bf16 %v1029, %v1028
      %v1044 = vpack.c.bf16 %v1031, %v1030
      %v1045 = vpack.c.bf16 %v1033, %v1032
      %v1046 = vpack.c.bf16 %v1035, %v1034
      %v1047 = vpack.c.bf16 %v1037, %v1036
      %v1048 = vpack.c.bf16 %v1039, %v1038
      %v1049 = vpack.c.bf16 %v1041, %v1040
      %v1058 = vunpack.c.l.b16 %v1042
      %v1059 = vunpack.c.h.b16 %v1042
      %v1060 = vunpack.c.l.b16 %v1043
      %v1061 = vunpack.c.h.b16 %v1043
      %v1062 = vunpack.c.l.b16 %v1044
      %v1063 = vunpack.c.h.b16 %v1044
      %v1064 = vunpack.c.l.b16 %v1045
      %v1065 = vunpack.c.h.b16 %v1045
      %v1066 = vunpack.c.l.b16 %v1046
      %v1067 = vunpack.c.h.b16 %v1046
      %v1068 = vunpack.c.l.b16 %v1047
      %v1069 = vunpack.c.h.b16 %v1047
      %v1070 = vunpack.c.l.b16 %v1048
      %v1071 = vunpack.c.h.b16 %v1048
      %v1072 = vunpack.c.l.b16 %v1049
      %v1073 = vunpack.c.h.b16 %v1049
      %v1074 = vpack.c.b16 %v1058, %v1058
      %v1075 = vpack.c.b16 %v1059, %v1059
      %v1076 = vpack.c.b16 %v1060, %v1060
      %v1077 = vpack.c.b16 %v1061, %v1061
      %v1078 = vpack.c.b16 %v1062, %v1062
      %v1079 = vpack.c.b16 %v1063, %v1063
      %v1080 = vpack.c.b16 %v1064, %v1064
      %v1081 = vpack.c.b16 %v1065, %v1065
      %v1082 = vpack.c.b16 %v1066, %v1066
      %v1083 = vpack.c.b16 %v1067, %v1067
      %v1084 = vpack.c.b16 %v1068, %v1068
      %v1085 = vpack.c.b16 %v1069, %v1069
      %v1086 = vpack.c.b16 %v1070, %v1070
      %v1087 = vpack.c.b16 %v1071, %v1071
      %v1088 = vpack.c.b16 %v1072, %v1072
      %v1089 = vpack.c.b16 %v1073, %v1073
      %1106 = vst [vmem:[%s251] sm:$0xf] %v1074
      %1107 = vst [vmem:[%s251 + $0x4] sm:$0xf] %v1075
      %1108 = vst [vmem:[%s251 + $0x8] sm:$0xf] %v1076
      %1109 = vst [vmem:[%s251 + $0xc] sm:$0xf] %v1077
      %1110 = vst [vmem:[%s251 + $0x10] sm:$0xf] %v1078
      %1111 = vst [vmem:[%s251 + $0x14] sm:$0xf] %v1079
      %1112 = vst [vmem:[%s251 + $0x18] sm:$0xf] %v1080
      %1113 = vst [vmem:[%s251 + $0x1c] sm:$0xf] %v1081
      %1114 = vst [vmem:[%s251 + $0x20] sm:$0xf] %v1082
      %1115 = vst [vmem:[%s251 + $0x24] sm:$0xf] %v1083
      %1116 = vst [vmem:[%s251 + $0x28] sm:$0xf] %v1084
      %1117 = vst [vmem:[%s251 + $0x2c] sm:$0xf] %v1085
      %1118 = vst [vmem:[%s251 + $0x30] sm:$0xf] %v1086
      %1119 = vst [vmem:[%s251 + $0x34] sm:$0xf] %v1087
      %1120 = vst [vmem:[%s251 + $0x38] sm:$0xf] %v1088
      %1121 = vst [vmem:[%s251 + $0x3c] sm:$0xf] %v1089
      %s1122 = smul.u32 16, %s16
      %p1123 = scmp.lt.s32.totalorder %s1122, 31
      %s1124 = scalar_select %p1123, %s1122, 31
      %s1125 = smul.addr %s1124, 4
      %s1126 = scalar_lea.vmem %s5, %s1125
      // Predicated region
      $region41: #{gat_net_forward.2} parent=39 // pred_check
        %p1127 = pneg %p149
      $region42: #{gat_net_forward.2} parent=39 // pred_check_branch
        %1129 = sbr.rel (%p1127) target = $region44
      $region43: #{gat_net_forward.2} parent=39 // pred_region
        %s1130 = smul.u32 16, %s16
      $region44: #{gat_net_forward.2} parent=39 // pred_fallthru
        _
    $region40: #{gat_net_forward.2} parent=5 // pred_fallthru
      _
    %p1131 = scmp.le.s32.totalorder 2, %s11
    // Predicated region
    $region45: #{gat_net_forward.2} parent=5 // pred_check
      %p1132 = pneg %p1131
    $region46: #{gat_net_forward.2} parent=5 // pred_check_branch
      %1134 = sbr.rel (%p1132) target = $region48
    $region47: #{gat_net_forward.2} parent=5 // pred_region
      %s1135 = ssub.s32 %s11, 2
      // Predicated region
      $region49: #{gat_net_forward.2} parent=47 // pred_check
        %p1136 = pneg %p155
      $region50: #{gat_net_forward.2} parent=47 // pred_check_branch
        %1138 = sbr.rel (%p1136) target = $region52
      $region51: #{gat_net_forward.2} parent=47 // pred_region
        %s1139 = smul.u32 16, %s17
        %p1140 = scmp.lt.s32.totalorder %s1139, 31
        %s1141 = scalar_select %p1140, %s1139, 31
        %s1142 = smul.addr %s1141, 4
        %s1143 = scalar_lea.vmem %s5, %s1142
      $region52: #{gat_net_forward.2} parent=47 // pred_fallthru
        _
    $region48: #{gat_net_forward.2} parent=5 // pred_fallthru
      _
  $region6: #{gat_net_forward.2} parent=0 // loop_footer
    %s15 = sadd.s32 1, %s11
  $region7: #{gat_net_forward.2} parent=0 // loop_footer_branch
    %10 = sbr.rel target = $region3
  $region8: #{gat_net_forward.2} parent=0 // loop_exit
    _

// kernel: gat_net_forward.3
$region0: #{gat_net_forward.3}
  #allocation0 [shape = 'u32[]', space=smem, size = 0x4, offset = 0x4, fixed_abs, tag = 'smem constant byte address 0x4 - core index']
  #allocation1 [shape = 'u32[144,128]{1,0:T(1,128)}', space=vmem, size = 0x12000, scoped, tag = 'internal scratch']
  %s0 = inlined_call_operand.vmem [shape: f32[256,1], index: 0, kind: input, shape index: {}]
  %s1 = inlined_call_operand.vmem [shape: f32[1,256], index: 1, kind: input, shape index: {}]
  %s2 = inlined_call_operand.vmem [shape: bf16[256,128], index: 2, kind: input, shape index: {}]
  %s3 = inlined_call_operand.vmem [shape: f32[1,128], index: 3, kind: input, shape index: {}]
  %s4 = inlined_call_operand.vmem [shape: bf16[256,256], index: 4, kind: input, shape index: {}]
  %s5 = inlined_call_operand.vmem [shape: f32[256,128], index: 5, kind: output, shape index: {}]
  %s6 = sld [smem:[#allocation0]]
  $region53: #{gat_net_forward.3} parent=0
    _
  %s8 = ssub.s32 1, %s6
  %s9 = scalar_select 0, %s8, %s6
  loop: start=0, step=1, limit=4
  $region2: #{gat_net_forward.3} parent=0 // loop_pre_header
    _
  $region3: #{gat_net_forward.3} parent=0 // loop_header
    %s11 = sphi 0, %s15
    %p12 = scmp.ge.s32.totalorder %s11, 4
    %s21 = sphi 0, %s23
    %s24 = sphi 0, %s21
    %s25 = sphi 0, %s24
    %s41 = sphi 0, %s25
    %s45 = sphi 0, %s45
    %s47 = sphi 0, %s45
    %s48 = sphi 0, %s47
    %s62 = sphi 0, %s48
    %s66 = sphi 0, %s66
    %s68 = sphi 0, %s66
    %s69 = sphi 0, %s68
    %s83 = sphi 0, %s69
    %s87 = sphi 0, %s87
    %s89 = sphi 0, %s87
    %s90 = sphi 0, %s89
    %s104 = sphi 0, %s90
    %s110 = sphi 0, %s112
    %s113 = sphi 0, %s110
    %s114 = sphi 0, %s113
    %s130 = sphi 0, %s114
    %s136 = sphi 0, %s138
    %s139 = sphi 0, %s136
    %s140 = sphi 0, %s139
    %s156 = sphi 0, %s140
  $region4: #{gat_net_forward.3} parent=0 // loop_header_branch
    %14 = sbr.rel (%p12) target = $region8
  $region5: #{gat_net_forward.3} parent=0 // loop_body
    %s16 = ssub.s32 %s11, 1
    %s17 = ssub.s32 %s11, 2
    %s18 = sadd.s32 %s11, 1
    %s19 = ssub.s32 %s11, %s18
    %p20 = scmp.eq.s32.totalorder %s19, 0
    %s22 = sadd.s32 %s21, 1
    %s23 = scalar_select %p20, %s21, %s22
    %p26 = pneg %p20
    %p27 = scmp.eq.s32.totalorder %s11, 1
    %p28 = por %p26, %p27
    %p29 = scmp.ne.s32.totalorder %s21, %s24
    %p30 = scmp.eq.s32.totalorder %s11, 0
    %p31 = por %p29, %p30
    %p32 = scmp.ne.s32.totalorder %s21, %s24
    %p33 = scmp.eq.s32.totalorder %s16, 1
    %p34 = por %p32, %p33
    %p35 = scmp.ne.s32.totalorder %s24, %s25
    %p36 = scmp.eq.s32.totalorder %s16, 0
    %p37 = por %p35, %p36
    %p38 = scmp.ne.s32.totalorder %s24, %s25
    %p39 = scmp.eq.s32.totalorder %s17, 1
    %p40 = por %p38, %p39
    %p42 = scmp.ne.s32.totalorder %s25, %s41
    %p43 = scmp.eq.s32.totalorder %s17, 0
    %p44 = por %p42, %p43
    %s46 = sadd.s32 %s45, 1
    %p49 = scmp.eq.s32.totalorder %s11, 1
    %p50 = scmp.ne.s32.totalorder %s45, %s47
    %p51 = scmp.eq.s32.totalorder %s11, 0
    %p52 = por %p50, %p51
    %p53 = scmp.ne.s32.totalorder %s45, %s47
    %p54 = scmp.eq.s32.totalorder %s16, 1
    %p55 = por %p53, %p54
    %p56 = scmp.ne.s32.totalorder %s47, %s48
    %p57 = scmp.eq.s32.totalorder %s16, 0
    %p58 = por %p56, %p57
    %p59 = scmp.ne.s32.totalorder %s47, %s48
    %p60 = scmp.eq.s32.totalorder %s17, 1
    %p61 = por %p59, %p60
    %p63 = scmp.ne.s32.totalorder %s48, %s62
    %p64 = scmp.eq.s32.totalorder %s17, 0
    %p65 = por %p63, %p64
    %s67 = sadd.s32 %s66, 1
    %p70 = scmp.eq.s32.totalorder %s11, 1
    %p71 = scmp.ne.s32.totalorder %s66, %s68
    %p72 = scmp.eq.s32.totalorder %s11, 0
    %p73 = por %p71, %p72
    %p74 = scmp.ne.s32.totalorder %s66, %s68
    %p75 = scmp.eq.s32.totalorder %s16, 1
    %p76 = por %p74, %p75
    %p77 = scmp.ne.s32.totalorder %s68, %s69
    %p78 = scmp.eq.s32.totalorder %s16, 0
    %p79 = por %p77, %p78
    %p80 = scmp.ne.s32.totalorder %s68, %s69
    %p81 = scmp.eq.s32.totalorder %s17, 1
    %p82 = por %p80, %p81
    %p84 = scmp.ne.s32.totalorder %s69, %s83
    %p85 = scmp.eq.s32.totalorder %s17, 0
    %p86 = por %p84, %p85
    %s88 = sadd.s32 %s87, 1
    %p91 = scmp.eq.s32.totalorder %s11, 1
    %p92 = scmp.ne.s32.totalorder %s87, %s89
    %p93 = scmp.eq.s32.totalorder %s11, 0
    %p94 = por %p92, %p93
    %p95 = scmp.ne.s32.totalorder %s87, %s89
    %p96 = scmp.eq.s32.totalorder %s16, 1
    %p97 = por %p95, %p96
    %p98 = scmp.ne.s32.totalorder %s89, %s90
    %p99 = scmp.eq.s32.totalorder %s16, 0
    %p100 = por %p98, %p99
    %p101 = scmp.ne.s32.totalorder %s89, %s90
    %p102 = scmp.eq.s32.totalorder %s17, 1
    %p103 = por %p101, %p102
    %p105 = scmp.ne.s32.totalorder %s90, %s104
    %p106 = scmp.eq.s32.totalorder %s17, 0
    %p107 = por %p105, %p106
    %s108 = ssub.s32 %s11, %s18
    %p109 = scmp.eq.s32.totalorder %s108, 0
    %s111 = sadd.s32 %s110, 1
    %s112 = scalar_select %p109, %s110, %s111
    %p115 = pneg %p109
    %p116 = scmp.eq.s32.totalorder %s11, 1
    %p117 = por %p115, %p116
    %p118 = scmp.ne.s32.totalorder %s110, %s113
    %p119 = scmp.eq.s32.totalorder %s11, 0
    %p120 = por %p118, %p119
    %p121 = scmp.ne.s32.totalorder %s110, %s113
    %p122 = scmp.eq.s32.totalorder %s16, 1
    %p123 = por %p121, %p122
    %p124 = scmp.ne.s32.totalorder %s113, %s114
    %p125 = scmp.eq.s32.totalorder %s16, 0
    %p126 = por %p124, %p125
    %p127 = scmp.ne.s32.totalorder %s113, %s114
    %p128 = scmp.eq.s32.totalorder %s17, 1
    %p129 = por %p127, %p128
    %p131 = scmp.ne.s32.totalorder %s114, %s130
    %p132 = scmp.eq.s32.totalorder %s17, 0
    %p133 = por %p131, %p132
    %s134 = ssub.s32 %s11, %s18
    %p135 = scmp.eq.s32.totalorder %s134, 0
    %s137 = sadd.s32 %s136, 1
    %s138 = scalar_select %p135, %s136, %s137
    %p141 = pneg %p135
    %p142 = scmp.eq.s32.totalorder %s11, 1
    %p143 = por %p141, %p142
    %p144 = scmp.ne.s32.totalorder %s136, %s139
    %p145 = scmp.eq.s32.totalorder %s11, 0
    %p146 = por %p144, %p145
    %p147 = scmp.ne.s32.totalorder %s136, %s139
    %p148 = scmp.eq.s32.totalorder %s16, 1
    %p149 = por %p147, %p148
    %p150 = scmp.ne.s32.totalorder %s139, %s140
    %p151 = scmp.eq.s32.totalorder %s16, 0
    %p152 = por %p150, %p151
    %p153 = scmp.ne.s32.totalorder %s139, %s140
    %p154 = scmp.eq.s32.totalorder %s17, 1
    %p155 = por %p153, %p154
    %p157 = scmp.ne.s32.totalorder %s140, %s156
    %p158 = scmp.eq.s32.totalorder %s17, 0
    %p159 = por %p157, %p158
    %p160 = scmp.le.s32.totalorder 1, %s11
    %p161 = scmp.lt.s32.totalorder %s11, 3
    %p162 = pnand %p160, %p161
    %p163 = pneg %p162
    // Predicated region
    $region9: #{gat_net_forward.3} parent=5 // pred_check
      _
    $region10: #{gat_net_forward.3} parent=5 // pred_check_branch
      %165 = sbr.rel (%p162) target = $region12
    $region11: #{gat_net_forward.3} parent=5 // pred_region
      %s166 = ssub.s32 %s11, 1
      // Predicated region
      $region13: #{gat_net_forward.3} parent=11 // pred_check
        %p167 = pneg %p58
      $region14: #{gat_net_forward.3} parent=11 // pred_check_branch
        %169 = sbr.rel (%p167) target = $region16
      $region15: #{gat_net_forward.3} parent=11 // pred_region
        _
      $region16: #{gat_net_forward.3} parent=11 // pred_fallthru
        _
      // Predicated region
      $region17: #{gat_net_forward.3} parent=11 // pred_check
        %p170 = pneg %p79
      $region18: #{gat_net_forward.3} parent=11 // pred_check_branch
        %172 = sbr.rel (%p170) target = $region20
      $region19: #{gat_net_forward.3} parent=11 // pred_region
        _
      $region20: #{gat_net_forward.3} parent=11 // pred_fallthru
        _
      // Predicated region
      $region21: #{gat_net_forward.3} parent=11 // pred_check
        %p173 = pneg %p100
      $region22: #{gat_net_forward.3} parent=11 // pred_check_branch
        %175 = sbr.rel (%p173) target = $region24
      $region23: #{gat_net_forward.3} parent=11 // pred_region
        _
      $region24: #{gat_net_forward.3} parent=11 // pred_fallthru
        _
    $region12: #{gat_net_forward.3} parent=5 // pred_fallthru
      _
    %p176 = scmp.lt.s32.totalorder %s11, 2
    // Predicated region
    $region25: #{gat_net_forward.3} parent=5 // pred_check
      %p177 = pneg %p176
    $region26: #{gat_net_forward.3} parent=5 // pred_check_branch
      %179 = sbr.rel (%p177) target = $region28
    $region27: #{gat_net_forward.3} parent=5 // pred_region
      // Predicated region
      $region29: #{gat_net_forward.3} parent=27 // pred_check
        %p180 = pneg %p31
      $region30: #{gat_net_forward.3} parent=27 // pred_check_branch
        %182 = sbr.rel (%p180) target = $region32
      $region31: #{gat_net_forward.3} parent=27 // pred_region
        %s183 = smul.u32 16, %s11
        %p184 = scmp.lt.s32.totalorder %s183, 31
        %s185 = scalar_select %p184, %s183, 31
        %s186 = smul.addr %s185, 8
        %s187 = scalar_lea.vmem %s0, %s186
        %s188 = smul.u32 16, %s11
      $region32: #{gat_net_forward.3} parent=27 // pred_fallthru
        _
      // Predicated region
      $region33: #{gat_net_forward.3} parent=27 // pred_check
        %p189 = pneg %p120
      $region34: #{gat_net_forward.3} parent=27 // pred_check_branch
        %191 = sbr.rel (%p189) target = $region36
      $region35: #{gat_net_forward.3} parent=27 // pred_region
        %s192 = smul.u32 16, %s11
        %p193 = scmp.lt.s32.totalorder %s192, 31
        %s194 = scalar_select %p193, %s192, 31
        %s195 = smul.addr %s194, 2
        %s196 = smul.addr %s195, 4
        %s197 = scalar_lea.vmem %s4, %s196
        %s198 = smul.u32 16, %s11
      $region36: #{gat_net_forward.3} parent=27 // pred_fallthru
        _
    $region28: #{gat_net_forward.3} parent=5 // pred_fallthru
      _
    %p199 = scmp.le.s32.totalorder 1, %s11
    %p200 = scmp.lt.s32.totalorder %s11, 3
    %p201 = pnand %p199, %p200
    %p202 = pneg %p201
    // Predicated region
    $region37: #{gat_net_forward.3} parent=5 // pred_check
      _
    $region38: #{gat_net_forward.3} parent=5 // pred_check_branch
      %204 = sbr.rel (%p201) target = $region40
    $region39: #{gat_net_forward.3} parent=5 // pred_region
      %s205 = ssub.s32 %s11, 1
      %s206 = smul.u32 16, %s16
      %p207 = scmp.lt.s32.totalorder %s206, 31
      %s208 = scalar_select %p207, %s206, 31
      %s209 = smul.addr %s208, 8
      %s210 = scalar_lea.vmem %s0, %s209
      %p211 = pneg %p37
      %p212 = pneg %p34
      %p213 = pneg %p58
      %p214 = pneg %p55
      %p215 = pneg %p79
      %p216 = pneg %p76
      %p217 = pneg %p100
      %p218 = pneg %p97
      %s219 = smul.u32 16, %s16
      %p220 = scmp.lt.s32.totalorder %s219, 31
      %s221 = scalar_select %p220, %s219, 31
      %s222 = smul.addr %s221, 2
      %s223 = smul.addr %s222, 4
      %s224 = scalar_lea.vmem %s4, %s223
      %p225 = pneg %p126
      %p226 = pneg %p123
      %p227 = pneg %p152
      %p228 = pneg %p149
      %s229 = smul.u32 16, %s16
      %p230 = scmp.lt.s32.totalorder %s229, 31
      %s231 = scalar_select %p230, %s229, 31
      %s232 = smul.addr %s231, 8
      %s233 = scalar_lea.vmem %s5, %s232
      %s234 = smul.u32 16, %s16
      %p235 = scmp.lt.s32.totalorder %s234, 31
      %s236 = scalar_select %p235, %s234, 31
      %s237 = smul.addr %s236, 8
      %s238 = scalar_lea.vmem %s0, %s237
      %s239 = smul.u32 16, %s16
      %s240 = smul.u32 16, %s16
      %p241 = scmp.lt.s32.totalorder %s240, 31
      %s242 = scalar_select %p241, %s240, 31
      %s243 = smul.addr %s242, 2
      %s244 = smul.addr %s243, 4
      %s245 = scalar_lea.vmem %s4, %s244
      %s246 = smul.u32 16, %s16
      %s247 = smul.u32 16, %s16
      %p248 = scmp.lt.s32.totalorder %s247, 31
      %s249 = scalar_select %p248, %s247, 31
      %s250 = smul.addr %s249, 8
      %s251 = scalar_lea.vmem %s5, %s250
      %s252 = smul.u32 16, %s16
      %v254 = vld [vmem:[%s238] sm:$0xff]
      %v255 = vld [vmem:[%s238 + $0x8] sm:$0xff]
      %v256 = vld [vmem:[%s238 + $0x10] sm:$0xff]
      %v257 = vld [vmem:[%s238 + $0x18] sm:$0xff]
      %v258 = vld [vmem:[%s238 + $0x20] sm:$0xff]
      %v259 = vld [vmem:[%s238 + $0x28] sm:$0xff]
      %v260 = vld [vmem:[%s238 + $0x30] sm:$0xff]
      %v261 = vld [vmem:[%s238 + $0x38] sm:$0xff]
      %v262 = vld [vmem:[%s238 + $0x40] sm:$0xff]
      %v263 = vld [vmem:[%s238 + $0x48] sm:$0xff]
      %v264 = vld [vmem:[%s238 + $0x50] sm:$0xff]
      %v265 = vld [vmem:[%s238 + $0x58] sm:$0xff]
      %v266 = vld [vmem:[%s238 + $0x60] sm:$0xff]
      %v267 = vld [vmem:[%s238 + $0x68] sm:$0xff]
      %v268 = vld [vmem:[%s238 + $0x70] sm:$0xff]
      %v269 = vld [vmem:[%s238 + $0x78] sm:$0xff]
      %v270 = vld [vmem:[%s1] sm:$0x3]
      %272 = vset.pattern.permute.xlu0 0
      %273 = vperm.xlu0 %272, %v254
      %v274 = vpop.permute.xlu0 %273
      %277 = vset.pattern.permute.xlu0 0
      %278 = vperm.xlu0 %277, %v255
      %v279 = vpop.permute.xlu0 %278
      %282 = vset.pattern.permute.xlu0 0
      %283 = vperm.xlu0 %282, %v256
      %v284 = vpop.permute.xlu0 %283
      %287 = vset.pattern.permute.xlu0 0
      %288 = vperm.xlu0 %287, %v257
      %v289 = vpop.permute.xlu0 %288
      %292 = vset.pattern.permute.xlu0 0
      %293 = vperm.xlu0 %292, %v258
      %v294 = vpop.permute.xlu0 %293
      %297 = vset.pattern.permute.xlu0 0
      %298 = vperm.xlu0 %297, %v259
      %v299 = vpop.permute.xlu0 %298
      %302 = vset.pattern.permute.xlu0 0
      %303 = vperm.xlu0 %302, %v260
      %v304 = vpop.permute.xlu0 %303
      %307 = vset.pattern.permute.xlu0 0
      %308 = vperm.xlu0 %307, %v261
      %v309 = vpop.permute.xlu0 %308
      %312 = vset.pattern.permute.xlu0 0
      %313 = vperm.xlu0 %312, %v262
      %v314 = vpop.permute.xlu0 %313
      %317 = vset.pattern.permute.xlu0 0
      %318 = vperm.xlu0 %317, %v263
      %v319 = vpop.permute.xlu0 %318
      %322 = vset.pattern.permute.xlu0 0
      %323 = vperm.xlu0 %322, %v264
      %v324 = vpop.permute.xlu0 %323
      %327 = vset.pattern.permute.xlu0 0
      %328 = vperm.xlu0 %327, %v265
      %v329 = vpop.permute.xlu0 %328
      %332 = vset.pattern.permute.xlu0 0
      %333 = vperm.xlu0 %332, %v266
      %v334 = vpop.permute.xlu0 %333
      %337 = vset.pattern.permute.xlu0 0
      %338 = vperm.xlu0 %337, %v267
      %v339 = vpop.permute.xlu0 %338
      %342 = vset.pattern.permute.xlu0 0
      %343 = vperm.xlu0 %342, %v268
      %v344 = vpop.permute.xlu0 %343
      %347 = vset.pattern.permute.xlu0 0
      %348 = vperm.xlu0 %347, %v269
      %v349 = vpop.permute.xlu0 %348
      %v352 = vlaneseq
      %v353 = vshrl.u32 %v352, 7
      %v354 = vsub.s32 0, %v353
      %v355 = vrot.slane %v270, %v354
      %v356 = vlaneseq
      %v357 = vshrl.u32 %v356, 7
      %v358 = vsub.s32 1, %v357
      %v359 = vrot.slane %v270, %v358
      %v362 = vadd.f32 %v274, %v355
      %v363 = vadd.f32 %v274, %v359
      %v364 = vadd.f32 %v279, %v355
      %v365 = vadd.f32 %v279, %v359
      %v366 = vadd.f32 %v284, %v355
      %v367 = vadd.f32 %v284, %v359
      %v368 = vadd.f32 %v289, %v355
      %v369 = vadd.f32 %v289, %v359
      %v370 = vadd.f32 %v294, %v355
      %v371 = vadd.f32 %v294, %v359
      %v372 = vadd.f32 %v299, %v355
      %v373 = vadd.f32 %v299, %v359
      %v374 = vadd.f32 %v304, %v355
      %v375 = vadd.f32 %v304, %v359
      %v376 = vadd.f32 %v309, %v355
      %v377 = vadd.f32 %v309, %v359
      %v378 = vadd.f32 %v314, %v355
      %v379 = vadd.f32 %v314, %v359
      %v380 = vadd.f32 %v319, %v355
      %v381 = vadd.f32 %v319, %v359
      %v382 = vadd.f32 %v324, %v355
      %v383 = vadd.f32 %v324, %v359
      %v384 = vadd.f32 %v329, %v355
      %v385 = vadd.f32 %v329, %v359
      %v386 = vadd.f32 %v334, %v355
      %v387 = vadd.f32 %v334, %v359
      %v388 = vadd.f32 %v339, %v355
      %v389 = vadd.f32 %v339, %v359
      %v390 = vadd.f32 %v344, %v355
      %v391 = vadd.f32 %v344, %v359
      %v392 = vadd.f32 %v349, %v355
      %v393 = vadd.f32 %v349, %v359
      %v394 = vmul.f32 %v362, 0.2
      %v395 = vmul.f32 %v363, 0.2
      %v396 = vmul.f32 %v364, 0.2
      %v397 = vmul.f32 %v365, 0.2
      %v398 = vmul.f32 %v366, 0.2
      %v399 = vmul.f32 %v367, 0.2
      %v400 = vmul.f32 %v368, 0.2
      %v401 = vmul.f32 %v369, 0.2
      %v402 = vmul.f32 %v370, 0.2
      %v403 = vmul.f32 %v371, 0.2
      %v404 = vmul.f32 %v372, 0.2
      %v405 = vmul.f32 %v373, 0.2
      %v406 = vmul.f32 %v374, 0.2
      %v407 = vmul.f32 %v375, 0.2
      %v408 = vmul.f32 %v376, 0.2
      %v409 = vmul.f32 %v377, 0.2
      %v410 = vmul.f32 %v378, 0.2
      %v411 = vmul.f32 %v379, 0.2
      %v412 = vmul.f32 %v380, 0.2
      %v413 = vmul.f32 %v381, 0.2
      %v414 = vmul.f32 %v382, 0.2
      %v415 = vmul.f32 %v383, 0.2
      %v416 = vmul.f32 %v384, 0.2
      %v417 = vmul.f32 %v385, 0.2
      %v418 = vmul.f32 %v386, 0.2
      %v419 = vmul.f32 %v387, 0.2
      %v420 = vmul.f32 %v388, 0.2
      %v421 = vmul.f32 %v389, 0.2
      %v422 = vmul.f32 %v390, 0.2
      %v423 = vmul.f32 %v391, 0.2
      %v424 = vmul.f32 %v392, 0.2
      %v425 = vmul.f32 %v393, 0.2
      %v426 = vmax.f32 %v362, %v394
      %v427 = vmax.f32 %v363, %v395
      %v428 = vmax.f32 %v364, %v396
      %v429 = vmax.f32 %v365, %v397
      %v430 = vmax.f32 %v366, %v398
      %v431 = vmax.f32 %v367, %v399
      %v432 = vmax.f32 %v368, %v400
      %v433 = vmax.f32 %v369, %v401
      %v434 = vmax.f32 %v370, %v402
      %v435 = vmax.f32 %v371, %v403
      %v436 = vmax.f32 %v372, %v404
      %v437 = vmax.f32 %v373, %v405
      %v438 = vmax.f32 %v374, %v406
      %v439 = vmax.f32 %v375, %v407
      %v440 = vmax.f32 %v376, %v408
      %v441 = vmax.f32 %v377, %v409
      %v442 = vmax.f32 %v378, %v410
      %v443 = vmax.f32 %v379, %v411
      %v444 = vmax.f32 %v380, %v412
      %v445 = vmax.f32 %v381, %v413
      %v446 = vmax.f32 %v382, %v414
      %v447 = vmax.f32 %v383, %v415
      %v448 = vmax.f32 %v384, %v416
      %v449 = vmax.f32 %v385, %v417
      %v450 = vmax.f32 %v386, %v418
      %v451 = vmax.f32 %v387, %v419
      %v452 = vmax.f32 %v388, %v420
      %v453 = vmax.f32 %v389, %v421
      %v454 = vmax.f32 %v390, %v422
      %v455 = vmax.f32 %v391, %v423
      %v456 = vmax.f32 %v392, %v424
      %v457 = vmax.f32 %v393, %v425
      %v458 = vld [vmem:[%s245] sm:$0xff]
      %v459 = vld [vmem:[%s245 + $0x8] sm:$0xff]
      %v460 = vld [vmem:[%s245 + $0x10] sm:$0xff]
      %v461 = vld [vmem:[%s245 + $0x18] sm:$0xff]
      %v462 = vld [vmem:[%s245 + $0x20] sm:$0xff]
      %v463 = vld [vmem:[%s245 + $0x28] sm:$0xff]
      %v464 = vld [vmem:[%s245 + $0x30] sm:$0xff]
      %v465 = vld [vmem:[%s245 + $0x38] sm:$0xff]
      %v466 = vld [vmem:[%s245 + $0x40] sm:$0xff]
      %v467 = vld [vmem:[%s245 + $0x48] sm:$0xff]
      %v468 = vld [vmem:[%s245 + $0x50] sm:$0xff]
      %v469 = vld [vmem:[%s245 + $0x58] sm:$0xff]
      %v470 = vld [vmem:[%s245 + $0x60] sm:$0xff]
      %v471 = vld [vmem:[%s245 + $0x68] sm:$0xff]
      %v472 = vld [vmem:[%s245 + $0x70] sm:$0xff]
      %v473 = vld [vmem:[%s245 + $0x78] sm:$0xff]
      %v474 = vunpack.c.l.bf16 %v458
      %v475 = vunpack.c.h.bf16 %v458
      %v476 = vunpack.c.l.bf16 %v459
      %v477 = vunpack.c.h.bf16 %v459
      %v478 = vunpack.c.l.bf16 %v460
      %v479 = vunpack.c.h.bf16 %v460
      %v480 = vunpack.c.l.bf16 %v461
      %v481 = vunpack.c.h.bf16 %v461
      %v482 = vunpack.c.l.bf16 %v462
      %v483 = vunpack.c.h.bf16 %v462
      %v484 = vunpack.c.l.bf16 %v463
      %v485 = vunpack.c.h.bf16 %v463
      %v486 = vunpack.c.l.bf16 %v464
      %v487 = vunpack.c.h.bf16 %v464
      %v488 = vunpack.c.l.bf16 %v465
      %v489 = vunpack.c.h.bf16 %v465
      %v490 = vunpack.c.l.bf16 %v466
      %v491 = vunpack.c.h.bf16 %v466
      %v492 = vunpack.c.l.bf16 %v467
      %v493 = vunpack.c.h.bf16 %v467
      %v494 = vunpack.c.l.bf16 %v468
      %v495 = vunpack.c.h.bf16 %v468
      %v496 = vunpack.c.l.bf16 %v469
      %v497 = vunpack.c.h.bf16 %v469
      %v498 = vunpack.c.l.bf16 %v470
      %v499 = vunpack.c.h.bf16 %v470
      %v500 = vunpack.c.l.bf16 %v471
      %v501 = vunpack.c.h.bf16 %v471
      %v502 = vunpack.c.l.bf16 %v472
      %v503 = vunpack.c.h.bf16 %v472
      %v504 = vunpack.c.l.bf16 %v473
      %v505 = vunpack.c.h.bf16 %v473
      %v506 = vadd.f32 %v426, %v474
      %v507 = vadd.f32 %v427, %v475
      %v508 = vadd.f32 %v428, %v476
      %v509 = vadd.f32 %v429, %v477
      %v510 = vadd.f32 %v430, %v478
      %v511 = vadd.f32 %v431, %v479
      %v512 = vadd.f32 %v432, %v480
      %v513 = vadd.f32 %v433, %v481
      %v514 = vadd.f32 %v434, %v482
      %v515 = vadd.f32 %v435, %v483
      %v516 = vadd.f32 %v436, %v484
      %v517 = vadd.f32 %v437, %v485
      %v518 = vadd.f32 %v438, %v486
      %v519 = vadd.f32 %v439, %v487
      %v520 = vadd.f32 %v440, %v488
      %v521 = vadd.f32 %v441, %v489
      %v522 = vadd.f32 %v442, %v490
      %v523 = vadd.f32 %v443, %v491
      %v524 = vadd.f32 %v444, %v492
      %v525 = vadd.f32 %v445, %v493
      %v526 = vadd.f32 %v446, %v494
      %v527 = vadd.f32 %v447, %v495
      %v528 = vadd.f32 %v448, %v496
      %v529 = vadd.f32 %v449, %v497
      %v530 = vadd.f32 %v450, %v498
      %v531 = vadd.f32 %v451, %v499
      %v532 = vadd.f32 %v452, %v500
      %v533 = vadd.f32 %v453, %v501
      %v534 = vadd.f32 %v454, %v502
      %v535 = vadd.f32 %v455, %v503
      %v536 = vadd.f32 %v456, %v504
      %v537 = vadd.f32 %v457, %v505
      %v538 = vmax.f32 %v506, %v507
      %539 = vmax.xlane.f32.xlu0 %v538
      %v540 = vpop.xlane.xlu0 %539
      %v541 = vmax.f32 %v508, %v509
      %542 = vmax.xlane.f32.xlu0 %v541
      %v543 = vpop.xlane.xlu0 %542
      %v544 = vmax.f32 %v510, %v511
      %545 = vmax.xlane.f32.xlu0 %v544
      %v546 = vpop.xlane.xlu0 %545
      %v547 = vmax.f32 %v512, %v513
      %548 = vmax.xlane.f32.xlu0 %v547
      %v549 = vpop.xlane.xlu0 %548
      %v550 = vmax.f32 %v514, %v515
      %551 = vmax.xlane.f32.xlu0 %v550
      %v552 = vpop.xlane.xlu0 %551
      %v553 = vmax.f32 %v516, %v517
      %554 = vmax.xlane.f32.xlu0 %v553
      %v555 = vpop.xlane.xlu0 %554
      %v556 = vmax.f32 %v518, %v519
      %557 = vmax.xlane.f32.xlu0 %v556
      %v558 = vpop.xlane.xlu0 %557
      %v559 = vmax.f32 %v520, %v521
      %560 = vmax.xlane.f32.xlu0 %v559
      %v561 = vpop.xlane.xlu0 %560
      %v562 = vmax.f32 %v522, %v523
      %563 = vmax.xlane.f32.xlu0 %v562
      %v564 = vpop.xlane.xlu0 %563
      %v565 = vmax.f32 %v524, %v525
      %566 = vmax.xlane.f32.xlu0 %v565
      %v567 = vpop.xlane.xlu0 %566
      %v568 = vmax.f32 %v526, %v527
      %569 = vmax.xlane.f32.xlu0 %v568
      %v570 = vpop.xlane.xlu0 %569
      %v571 = vmax.f32 %v528, %v529
      %572 = vmax.xlane.f32.xlu0 %v571
      %v573 = vpop.xlane.xlu0 %572
      %v574 = vmax.f32 %v530, %v531
      %575 = vmax.xlane.f32.xlu0 %v574
      %v576 = vpop.xlane.xlu0 %575
      %v577 = vmax.f32 %v532, %v533
      %578 = vmax.xlane.f32.xlu0 %v577
      %v579 = vpop.xlane.xlu0 %578
      %v580 = vmax.f32 %v534, %v535
      %581 = vmax.xlane.f32.xlu0 %v580
      %v582 = vpop.xlane.xlu0 %581
      %v583 = vmax.f32 %v536, %v537
      %584 = vmax.xlane.f32.xlu0 %v583
      %v585 = vpop.xlane.xlu0 %584
      %v586 = vsub.f32 %v506, %v540
      %v587 = vsub.f32 %v507, %v540
      %v588 = vsub.f32 %v508, %v543
      %v589 = vsub.f32 %v509, %v543
      %v590 = vsub.f32 %v510, %v546
      %v591 = vsub.f32 %v511, %v546
      %v592 = vsub.f32 %v512, %v549
      %v593 = vsub.f32 %v513, %v549
      %v594 = vsub.f32 %v514, %v552
      %v595 = vsub.f32 %v515, %v552
      %v596 = vsub.f32 %v516, %v555
      %v597 = vsub.f32 %v517, %v555
      %v598 = vsub.f32 %v518, %v558
      %v599 = vsub.f32 %v519, %v558
      %v600 = vsub.f32 %v520, %v561
      %v601 = vsub.f32 %v521, %v561
      %v602 = vsub.f32 %v522, %v564
      %v603 = vsub.f32 %v523, %v564
      %v604 = vsub.f32 %v524, %v567
      %v605 = vsub.f32 %v525, %v567
      %v606 = vsub.f32 %v526, %v570
      %v607 = vsub.f32 %v527, %v570
      %v608 = vsub.f32 %v528, %v573
      %v609 = vsub.f32 %v529, %v573
      %v610 = vsub.f32 %v530, %v576
      %v611 = vsub.f32 %v531, %v576
      %v612 = vsub.f32 %v532, %v579
      %v613 = vsub.f32 %v533, %v579
      %v614 = vsub.f32 %v534, %v582
      %v615 = vsub.f32 %v535, %v582
      %v616 = vsub.f32 %v536, %v585
      %v617 = vsub.f32 %v537, %v585
      %v618 = vmul.f32 %v586, 1.442695
      %v619 = vpow.pop %v618
      %v620 = vmul.f32 %v587, 1.442695
      %v621 = vpow.pop %v620
      %v622 = vmul.f32 %v588, 1.442695
      %v623 = vpow.pop %v622
      %v624 = vmul.f32 %v589, 1.442695
      %v625 = vpow.pop %v624
      %v626 = vmul.f32 %v590, 1.442695
      %v627 = vpow.pop %v626
      %v628 = vmul.f32 %v591, 1.442695
      %v629 = vpow.pop %v628
      %v630 = vmul.f32 %v592, 1.442695
      %v631 = vpow.pop %v630
      %v632 = vmul.f32 %v593, 1.442695
      %v633 = vpow.pop %v632
      %v634 = vmul.f32 %v594, 1.442695
      %v635 = vpow.pop %v634
      %v636 = vmul.f32 %v595, 1.442695
      %v637 = vpow.pop %v636
      %v638 = vmul.f32 %v596, 1.442695
      %v639 = vpow.pop %v638
      %v640 = vmul.f32 %v597, 1.442695
      %v641 = vpow.pop %v640
      %v642 = vmul.f32 %v598, 1.442695
      %v643 = vpow.pop %v642
      %v644 = vmul.f32 %v599, 1.442695
      %v645 = vpow.pop %v644
      %v646 = vmul.f32 %v600, 1.442695
      %v647 = vpow.pop %v646
      %v648 = vmul.f32 %v601, 1.442695
      %v649 = vpow.pop %v648
      %v650 = vmul.f32 %v602, 1.442695
      %v651 = vpow.pop %v650
      %v652 = vmul.f32 %v603, 1.442695
      %v653 = vpow.pop %v652
      %v654 = vmul.f32 %v604, 1.442695
      %v655 = vpow.pop %v654
      %v656 = vmul.f32 %v605, 1.442695
      %v657 = vpow.pop %v656
      %v658 = vmul.f32 %v606, 1.442695
      %v659 = vpow.pop %v658
      %v660 = vmul.f32 %v607, 1.442695
      %v661 = vpow.pop %v660
      %v662 = vmul.f32 %v608, 1.442695
      %v663 = vpow.pop %v662
      %v664 = vmul.f32 %v609, 1.442695
      %v665 = vpow.pop %v664
      %v666 = vmul.f32 %v610, 1.442695
      %v667 = vpow.pop %v666
      %v668 = vmul.f32 %v611, 1.442695
      %v669 = vpow.pop %v668
      %v670 = vmul.f32 %v612, 1.442695
      %v671 = vpow.pop %v670
      %v672 = vmul.f32 %v613, 1.442695
      %v673 = vpow.pop %v672
      %v674 = vmul.f32 %v614, 1.442695
      %v675 = vpow.pop %v674
      %v676 = vmul.f32 %v615, 1.442695
      %v677 = vpow.pop %v676
      %v678 = vmul.f32 %v616, 1.442695
      %v679 = vpow.pop %v678
      %v680 = vmul.f32 %v617, 1.442695
      %v681 = vpow.pop %v680
      %v682 = vadd.f32 %v619, %v621
      %683 = vadd.xlane.f32.xlu0 %v682
      %v684 = vpop.xlane.xlu0 %683
      %v685 = vadd.f32 %v623, %v625
      %686 = vadd.xlane.f32.xlu0 %v685
      %v687 = vpop.xlane.xlu0 %686
      %v688 = vadd.f32 %v627, %v629
      %689 = vadd.xlane.f32.xlu0 %v688
      %v690 = vpop.xlane.xlu0 %689
      %v691 = vadd.f32 %v631, %v633
      %692 = vadd.xlane.f32.xlu0 %v691
      %v693 = vpop.xlane.xlu0 %692
      %v694 = vadd.f32 %v635, %v637
      %695 = vadd.xlane.f32.xlu0 %v694
      %v696 = vpop.xlane.xlu0 %695
      %v697 = vadd.f32 %v639, %v641
      %698 = vadd.xlane.f32.xlu0 %v697
      %v699 = vpop.xlane.xlu0 %698
      %v700 = vadd.f32 %v643, %v645
      %701 = vadd.xlane.f32.xlu0 %v700
      %v702 = vpop.xlane.xlu0 %701
      %v703 = vadd.f32 %v647, %v649
      %704 = vadd.xlane.f32.xlu0 %v703
      %v705 = vpop.xlane.xlu0 %704
      %v706 = vadd.f32 %v651, %v653
      %707 = vadd.xlane.f32.xlu0 %v706
      %v708 = vpop.xlane.xlu0 %707
      %v709 = vadd.f32 %v655, %v657
      %710 = vadd.xlane.f32.xlu0 %v709
      %v711 = vpop.xlane.xlu0 %710
      %v712 = vadd.f32 %v659, %v661
      %713 = vadd.xlane.f32.xlu0 %v712
      %v714 = vpop.xlane.xlu0 %713
      %v715 = vadd.f32 %v663, %v665
      %716 = vadd.xlane.f32.xlu0 %v715
      %v717 = vpop.xlane.xlu0 %716
      %v718 = vadd.f32 %v667, %v669
      %719 = vadd.xlane.f32.xlu0 %v718
      %v720 = vpop.xlane.xlu0 %719
      %v721 = vadd.f32 %v671, %v673
      %722 = vadd.xlane.f32.xlu0 %v721
      %v723 = vpop.xlane.xlu0 %722
      %v724 = vadd.f32 %v675, %v677
      %725 = vadd.xlane.f32.xlu0 %v724
      %v726 = vpop.xlane.xlu0 %725
      %v727 = vadd.f32 %v679, %v681
      %728 = vadd.xlane.f32.xlu0 %v727
      %v729 = vpop.xlane.xlu0 %728
      %v730 = vrcp.pop %v684
      %v731 = vrcp.pop %v687
      %v732 = vrcp.pop %v690
      %v733 = vrcp.pop %v693
      %v734 = vrcp.pop %v696
      %v735 = vrcp.pop %v699
      %v736 = vrcp.pop %v702
      %v737 = vrcp.pop %v705
      %v738 = vrcp.pop %v708
      %v739 = vrcp.pop %v711
      %v740 = vrcp.pop %v714
      %v741 = vrcp.pop %v717
      %v742 = vrcp.pop %v720
      %v743 = vrcp.pop %v723
      %v744 = vrcp.pop %v726
      %v745 = vrcp.pop %v729
      %v746 = vmul.f32 %v619, %v730
      %v747 = vmul.f32 %v621, %v730
      %v748 = vmul.f32 %v623, %v731
      %v749 = vmul.f32 %v625, %v731
      %v750 = vmul.f32 %v627, %v732
      %v751 = vmul.f32 %v629, %v732
      %v752 = vmul.f32 %v631, %v733
      %v753 = vmul.f32 %v633, %v733
      %v754 = vmul.f32 %v635, %v734
      %v755 = vmul.f32 %v637, %v734
      %v756 = vmul.f32 %v639, %v735
      %v757 = vmul.f32 %v641, %v735
      %v758 = vmul.f32 %v643, %v736
      %v759 = vmul.f32 %v645, %v736
      %v760 = vmul.f32 %v647, %v737
      %v761 = vmul.f32 %v649, %v737
      %v762 = vmul.f32 %v651, %v738
      %v763 = vmul.f32 %v653, %v738
      %v764 = vmul.f32 %v655, %v739
      %v765 = vmul.f32 %v657, %v739
      %v766 = vmul.f32 %v659, %v740
      %v767 = vmul.f32 %v661, %v740
      %v768 = vmul.f32 %v663, %v741
      %v769 = vmul.f32 %v665, %v741
      %v770 = vmul.f32 %v667, %v742
      %v771 = vmul.f32 %v669, %v742
      %v772 = vmul.f32 %v671, %v743
      %v773 = vmul.f32 %v673, %v743
      %v774 = vmul.f32 %v675, %v744
      %v775 = vmul.f32 %v677, %v744
      %v776 = vmul.f32 %v679, %v745
      %v777 = vmul.f32 %v681, %v745
      %v778 = vpack.c.bf16 %v748, %v746
      %v779 = vpack.c.bf16 %v749, %v747
      %v780 = vpack.c.bf16 %v752, %v750
      %v781 = vpack.c.bf16 %v753, %v751
      %v782 = vpack.c.bf16 %v756, %v754
      %v783 = vpack.c.bf16 %v757, %v755
      %v784 = vpack.c.bf16 %v760, %v758
      %v785 = vpack.c.bf16 %v761, %v759
      %v786 = vpack.c.bf16 %v764, %v762
      %v787 = vpack.c.bf16 %v765, %v763
      %v788 = vpack.c.bf16 %v768, %v766
      %v789 = vpack.c.bf16 %v769, %v767
      %v790 = vpack.c.bf16 %v772, %v770
      %v791 = vpack.c.bf16 %v773, %v771
      %v792 = vpack.c.bf16 %v776, %v774
      %v793 = vpack.c.bf16 %v777, %v775
      %v794 = vld [vmem:[%s2] sm:$0xf]
      %v795 = vld [vmem:[%s2 + $0x4] sm:$0xf]
      %v796 = vld [vmem:[%s2 + $0x8] sm:$0xf]
      %v797 = vld [vmem:[%s2 + $0xc] sm:$0xf]
      %v798 = vld [vmem:[%s2 + $0x10] sm:$0xf]
      %v799 = vld [vmem:[%s2 + $0x14] sm:$0xf]
      %v800 = vld [vmem:[%s2 + $0x18] sm:$0xf]
      %v801 = vld [vmem:[%s2 + $0x1c] sm:$0xf]
      %v802 = vld [vmem:[%s2 + $0x20] sm:$0xf]
      %v803 = vld [vmem:[%s2 + $0x24] sm:$0xf]
      %v804 = vld [vmem:[%s2 + $0x28] sm:$0xf]
      %v805 = vld [vmem:[%s2 + $0x2c] sm:$0xf]
      %v806 = vld [vmem:[%s2 + $0x30] sm:$0xf]
      %v807 = vld [vmem:[%s2 + $0x34] sm:$0xf]
      %v808 = vld [vmem:[%s2 + $0x38] sm:$0xf]
      %v809 = vld [vmem:[%s2 + $0x3c] sm:$0xf]
      %v810 = vld [vmem:[%s2 + $0x40] sm:$0xf]
      %v811 = vld [vmem:[%s2 + $0x44] sm:$0xf]
      %v812 = vld [vmem:[%s2 + $0x48] sm:$0xf]
      %v813 = vld [vmem:[%s2 + $0x4c] sm:$0xf]
      %v814 = vld [vmem:[%s2 + $0x50] sm:$0xf]
      %v815 = vld [vmem:[%s2 + $0x54] sm:$0xf]
      %v816 = vld [vmem:[%s2 + $0x58] sm:$0xf]
      %v817 = vld [vmem:[%s2 + $0x5c] sm:$0xf]
      %v818 = vld [vmem:[%s2 + $0x60] sm:$0xf]
      %v819 = vld [vmem:[%s2 + $0x64] sm:$0xf]
      %v820 = vld [vmem:[%s2 + $0x68] sm:$0xf]
      %v821 = vld [vmem:[%s2 + $0x6c] sm:$0xf]
      %v822 = vld [vmem:[%s2 + $0x70] sm:$0xf]
      %v823 = vld [vmem:[%s2 + $0x74] sm:$0xf]
      %v824 = vld [vmem:[%s2 + $0x78] sm:$0xf]
      %v825 = vld [vmem:[%s2 + $0x7c] sm:$0xf]
      %v826 = vld [vmem:[%s3] sm:$0x1]
      %v828 = vlaneseq
      %v829 = vshrl.u32 %v828, 7
      %v830 = vsub.s32 0, %v829
      %v831 = vrot.slane %v826, %v830
      %v865 = vunpack.c.l.b16 %v794
      %v866 = vunpack.c.l.b16 %v795
      %v867 = vunpack.c.l.b16 %v796
      %v868 = vunpack.c.l.b16 %v797
      %v869 = vunpack.c.l.b16 %v798
      %v870 = vunpack.c.l.b16 %v799
      %v871 = vunpack.c.l.b16 %v800
      %v872 = vunpack.c.l.b16 %v801
      %v873 = vunpack.c.l.b16 %v802
      %v874 = vunpack.c.l.b16 %v803
      %v875 = vunpack.c.l.b16 %v804
      %v876 = vunpack.c.l.b16 %v805
      %v877 = vunpack.c.l.b16 %v806
      %v878 = vunpack.c.l.b16 %v807
      %v879 = vunpack.c.l.b16 %v808
      %v880 = vunpack.c.l.b16 %v809
      %v881 = vunpack.c.l.b16 %v810
      %v882 = vunpack.c.l.b16 %v811
      %v883 = vunpack.c.l.b16 %v812
      %v884 = vunpack.c.l.b16 %v813
      %v885 = vunpack.c.l.b16 %v814
      %v886 = vunpack.c.l.b16 %v815
      %v887 = vunpack.c.l.b16 %v816
      %v888 = vunpack.c.l.b16 %v817
      %v889 = vunpack.c.l.b16 %v818
      %v890 = vunpack.c.l.b16 %v819
      %v891 = vunpack.c.l.b16 %v820
      %v892 = vunpack.c.l.b16 %v821
      %v893 = vunpack.c.l.b16 %v822
      %v894 = vunpack.c.l.b16 %v823
      %v895 = vunpack.c.l.b16 %v824
      %v896 = vunpack.c.l.b16 %v825
      %v897 = vpack.c.b16 %v866, %v865
      %v898 = vpack.c.b16 %v868, %v867
      %v899 = vpack.c.b16 %v870, %v869
      %v900 = vpack.c.b16 %v872, %v871
      %v901 = vpack.c.b16 %v874, %v873
      %v902 = vpack.c.b16 %v876, %v875
      %v903 = vpack.c.b16 %v878, %v877
      %v904 = vpack.c.b16 %v880, %v879
      %v905 = vpack.c.b16 %v882, %v881
      %v906 = vpack.c.b16 %v884, %v883
      %v907 = vpack.c.b16 %v886, %v885
      %v908 = vpack.c.b16 %v888, %v887
      %v909 = vpack.c.b16 %v890, %v889
      %v910 = vpack.c.b16 %v892, %v891
      %v911 = vpack.c.b16 %v894, %v893
      %v912 = vpack.c.b16 %v896, %v895
      %929 = vmatprep.subr.bf16.mxu0 0
      %930 = vmatpush1.bf16.msra.mxu0 %v904
      %931 = vmatprep.subr.bf16.mxu0 0
      %932 = vmatpush1.bf16.msra.mxu0 %v903
      %933 = vmatprep.subr.bf16.mxu0 0
      %934 = vmatpush1.bf16.msra.mxu0 %v902
      %935 = vmatprep.subr.bf16.mxu0 0
      %936 = vmatpush1.bf16.msra.mxu0 %v901
      %937 = vmatprep.subr.bf16.mxu0 0
      %938 = vmatpush1.bf16.msra.mxu0 %v900
      %939 = vmatprep.subr.bf16.mxu0 0
      %940 = vmatpush1.bf16.msra.mxu0 %v899
      %941 = vmatprep.subr.bf16.mxu0 0
      %942 = vmatpush1.bf16.msra.mxu0 %v898
      %943 = vmatprep.subr.bf16.mxu0 0
      %944 = vmatpush1.bf16.msra.mxu0 %v897
      %945 = vmatprep.subr.bf16.mxu0 0
      %946 = vmatpush2.bf16.msra.mxu0 %v912
      %947 = vmatprep.subr.bf16.mxu0 0
      %948 = vmatpush2.bf16.msra.mxu0 %v911
      %949 = vmatprep.subr.bf16.mxu0 0
      %950 = vmatpush2.bf16.msra.mxu0 %v910
      %951 = vmatprep.subr.bf16.mxu0 0
      %952 = vmatpush2.bf16.msra.mxu0 %v909
      %953 = vmatprep.subr.bf16.mxu0 0
      %954 = vmatpush2.bf16.msra.mxu0 %v908
      %955 = vmatprep.subr.bf16.mxu0 0
      %956 = vmatpush2.bf16.msra.mxu0 %v907
      %957 = vmatprep.subr.bf16.mxu0 0
      %958 = vmatpush2.bf16.msra.mxu0 %v906
      %959 = vmatprep.subr.bf16.mxu0 0
      %960 = vmatpush2.bf16.msra.mxu0 %v905
      %961 = vmatprep.mubr.bf16.mxu0 %v779
      %962 = vmatmul.mubr.bf16.gmra.mxu0 %v778
      %v963 = vpop.f32.mrf.mxu0
      %v964 = vadd.f32 %v831, %v963
      %v965 = vpop.f32.mrf.mxu0
      %v966 = vpop.f32.mrf.mxu0
      %v967 = vadd.f32 %v831, %v966
      %v968 = vpop.f32.mrf.mxu0
      %969 = vmatprep.mubr.bf16.mxu0 %v781
      %970 = vmatmul.mubr.bf16.gmra.mxu0 %v780
      %v971 = vpop.f32.mrf.mxu0
      %v972 = vadd.f32 %v831, %v971
      %v973 = vpop.f32.mrf.mxu0
      %v974 = vpop.f32.mrf.mxu0
      %v975 = vadd.f32 %v831, %v974
      %v976 = vpop.f32.mrf.mxu0
      %977 = vmatprep.mubr.bf16.mxu0 %v783
      %978 = vmatmul.mubr.bf16.gmra.mxu0 %v782
      %v979 = vpop.f32.mrf.mxu0
      %v980 = vadd.f32 %v831, %v979
      %v981 = vpop.f32.mrf.mxu0
      %v982 = vpop.f32.mrf.mxu0
      %v983 = vadd.f32 %v831, %v982
      %v984 = vpop.f32.mrf.mxu0
      %985 = vmatprep.mubr.bf16.mxu0 %v785
      %986 = vmatmul.mubr.bf16.gmra.mxu0 %v784
      %v987 = vpop.f32.mrf.mxu0
      %v988 = vadd.f32 %v831, %v987
      %v989 = vpop.f32.mrf.mxu0
      %v990 = vpop.f32.mrf.mxu0
      %v991 = vadd.f32 %v831, %v990
      %v992 = vpop.f32.mrf.mxu0
      %993 = vmatprep.mubr.bf16.mxu0 %v787
      %994 = vmatmul.mubr.bf16.gmra.mxu0 %v786
      %v995 = vpop.f32.mrf.mxu0
      %v996 = vadd.f32 %v831, %v995
      %v997 = vpop.f32.mrf.mxu0
      %v998 = vpop.f32.mrf.mxu0
      %v999 = vadd.f32 %v831, %v998
      %v1000 = vpop.f32.mrf.mxu0
      %1001 = vmatprep.mubr.bf16.mxu0 %v789
      %1002 = vmatmul.mubr.bf16.gmra.mxu0 %v788
      %v1003 = vpop.f32.mrf.mxu0
      %v1004 = vadd.f32 %v831, %v1003
      %v1005 = vpop.f32.mrf.mxu0
      %v1006 = vpop.f32.mrf.mxu0
      %v1007 = vadd.f32 %v831, %v1006
      %v1008 = vpop.f32.mrf.mxu0
      %1009 = vmatprep.mubr.bf16.mxu0 %v791
      %1010 = vmatmul.mubr.bf16.gmra.mxu0 %v790
      %v1011 = vpop.f32.mrf.mxu0
      %v1012 = vadd.f32 %v831, %v1011
      %v1013 = vpop.f32.mrf.mxu0
      %v1014 = vpop.f32.mrf.mxu0
      %v1015 = vadd.f32 %v831, %v1014
      %v1016 = vpop.f32.mrf.mxu0
      %1017 = vmatprep.mubr.bf16.mxu0 %v793
      %1018 = vmatmul.mubr.bf16.gmra.mxu0 %v792
      %v1019 = vpop.f32.mrf.mxu0
      %v1020 = vadd.f32 %v831, %v1019
      %v1021 = vpop.f32.mrf.mxu0
      %v1022 = vpop.f32.mrf.mxu0
      %v1023 = vadd.f32 %v831, %v1022
      %v1024 = vpop.f32.mrf.mxu0
      %1025 = vdwg.mxu0
      %1026 = vmax.xlane.f32.xlu0 %v964
      %v1027 = vpop.xlane.xlu0 %1026
      %1028 = vmax.xlane.f32.xlu0 %v967
      %v1029 = vpop.xlane.xlu0 %1028
      %1030 = vmax.xlane.f32.xlu0 %v972
      %v1031 = vpop.xlane.xlu0 %1030
      %1032 = vmax.xlane.f32.xlu0 %v975
      %v1033 = vpop.xlane.xlu0 %1032
      %1034 = vmax.xlane.f32.xlu0 %v980
      %v1035 = vpop.xlane.xlu0 %1034
      %1036 = vmax.xlane.f32.xlu0 %v983
      %v1037 = vpop.xlane.xlu0 %1036
      %1038 = vmax.xlane.f32.xlu0 %v988
      %v1039 = vpop.xlane.xlu0 %1038
      %1040 = vmax.xlane.f32.xlu0 %v991
      %v1041 = vpop.xlane.xlu0 %1040
      %1042 = vmax.xlane.f32.xlu0 %v996
      %v1043 = vpop.xlane.xlu0 %1042
      %1044 = vmax.xlane.f32.xlu0 %v999
      %v1045 = vpop.xlane.xlu0 %1044
      %1046 = vmax.xlane.f32.xlu0 %v1004
      %v1047 = vpop.xlane.xlu0 %1046
      %1048 = vmax.xlane.f32.xlu0 %v1007
      %v1049 = vpop.xlane.xlu0 %1048
      %1050 = vmax.xlane.f32.xlu0 %v1012
      %v1051 = vpop.xlane.xlu0 %1050
      %1052 = vmax.xlane.f32.xlu0 %v1015
      %v1053 = vpop.xlane.xlu0 %1052
      %1054 = vmax.xlane.f32.xlu0 %v1020
      %v1055 = vpop.xlane.xlu0 %1054
      %1056 = vmax.xlane.f32.xlu0 %v1023
      %v1057 = vpop.xlane.xlu0 %1056
      %v1058 = vsub.f32 %v964, %v1027
      %v1059 = vsub.f32 %v967, %v1029
      %v1060 = vsub.f32 %v972, %v1031
      %v1061 = vsub.f32 %v975, %v1033
      %v1062 = vsub.f32 %v980, %v1035
      %v1063 = vsub.f32 %v983, %v1037
      %v1064 = vsub.f32 %v988, %v1039
      %v1065 = vsub.f32 %v991, %v1041
      %v1066 = vsub.f32 %v996, %v1043
      %v1067 = vsub.f32 %v999, %v1045
      %v1068 = vsub.f32 %v1004, %v1047
      %v1069 = vsub.f32 %v1007, %v1049
      %v1070 = vsub.f32 %v1012, %v1051
      %v1071 = vsub.f32 %v1015, %v1053
      %v1072 = vsub.f32 %v1020, %v1055
      %v1073 = vsub.f32 %v1023, %v1057
      %v1074 = vmul.f32 %v1058, 1.442695
      %v1075 = vpow.pop %v1074
      %v1076 = vmul.f32 %v1059, 1.442695
      %v1077 = vpow.pop %v1076
      %v1078 = vmul.f32 %v1060, 1.442695
      %v1079 = vpow.pop %v1078
      %v1080 = vmul.f32 %v1061, 1.442695
      %v1081 = vpow.pop %v1080
      %v1082 = vmul.f32 %v1062, 1.442695
      %v1083 = vpow.pop %v1082
      %v1084 = vmul.f32 %v1063, 1.442695
      %v1085 = vpow.pop %v1084
      %v1086 = vmul.f32 %v1064, 1.442695
      %v1087 = vpow.pop %v1086
      %v1088 = vmul.f32 %v1065, 1.442695
      %v1089 = vpow.pop %v1088
      %v1090 = vmul.f32 %v1066, 1.442695
      %v1091 = vpow.pop %v1090
      %v1092 = vmul.f32 %v1067, 1.442695
      %v1093 = vpow.pop %v1092
      %v1094 = vmul.f32 %v1068, 1.442695
      %v1095 = vpow.pop %v1094
      %v1096 = vmul.f32 %v1069, 1.442695
      %v1097 = vpow.pop %v1096
      %v1098 = vmul.f32 %v1070, 1.442695
      %v1099 = vpow.pop %v1098
      %v1100 = vmul.f32 %v1071, 1.442695
      %v1101 = vpow.pop %v1100
      %v1102 = vmul.f32 %v1072, 1.442695
      %v1103 = vpow.pop %v1102
      %v1104 = vmul.f32 %v1073, 1.442695
      %v1105 = vpow.pop %v1104
      %1106 = vadd.xlane.f32.xlu0 %v1075
      %v1107 = vpop.xlane.xlu0 %1106
      %1108 = vadd.xlane.f32.xlu0 %v1077
      %v1109 = vpop.xlane.xlu0 %1108
      %1110 = vadd.xlane.f32.xlu0 %v1079
      %v1111 = vpop.xlane.xlu0 %1110
      %1112 = vadd.xlane.f32.xlu0 %v1081
      %v1113 = vpop.xlane.xlu0 %1112
      %1114 = vadd.xlane.f32.xlu0 %v1083
      %v1115 = vpop.xlane.xlu0 %1114
      %1116 = vadd.xlane.f32.xlu0 %v1085
      %v1117 = vpop.xlane.xlu0 %1116
      %1118 = vadd.xlane.f32.xlu0 %v1087
      %v1119 = vpop.xlane.xlu0 %1118
      %1120 = vadd.xlane.f32.xlu0 %v1089
      %v1121 = vpop.xlane.xlu0 %1120
      %1122 = vadd.xlane.f32.xlu0 %v1091
      %v1123 = vpop.xlane.xlu0 %1122
      %1124 = vadd.xlane.f32.xlu0 %v1093
      %v1125 = vpop.xlane.xlu0 %1124
      %1126 = vadd.xlane.f32.xlu0 %v1095
      %v1127 = vpop.xlane.xlu0 %1126
      %1128 = vadd.xlane.f32.xlu0 %v1097
      %v1129 = vpop.xlane.xlu0 %1128
      %1130 = vadd.xlane.f32.xlu0 %v1099
      %v1131 = vpop.xlane.xlu0 %1130
      %1132 = vadd.xlane.f32.xlu0 %v1101
      %v1133 = vpop.xlane.xlu0 %1132
      %1134 = vadd.xlane.f32.xlu0 %v1103
      %v1135 = vpop.xlane.xlu0 %1134
      %1136 = vadd.xlane.f32.xlu0 %v1105
      %v1137 = vpop.xlane.xlu0 %1136
      %v1138 = vlog2.pop %v1107
      %v1139 = vmul.f32 %v1138, 0.6931472
      %v1140 = vlog2.pop %v1109
      %v1141 = vmul.f32 %v1140, 0.6931472
      %v1142 = vlog2.pop %v1111
      %v1143 = vmul.f32 %v1142, 0.6931472
      %v1144 = vlog2.pop %v1113
      %v1145 = vmul.f32 %v1144, 0.6931472
      %v1146 = vlog2.pop %v1115
      %v1147 = vmul.f32 %v1146, 0.6931472
      %v1148 = vlog2.pop %v1117
      %v1149 = vmul.f32 %v1148, 0.6931472
      %v1150 = vlog2.pop %v1119
      %v1151 = vmul.f32 %v1150, 0.6931472
      %v1152 = vlog2.pop %v1121
      %v1153 = vmul.f32 %v1152, 0.6931472
      %v1154 = vlog2.pop %v1123
      %v1155 = vmul.f32 %v1154, 0.6931472
      %v1156 = vlog2.pop %v1125
      %v1157 = vmul.f32 %v1156, 0.6931472
      %v1158 = vlog2.pop %v1127
      %v1159 = vmul.f32 %v1158, 0.6931472
      %v1160 = vlog2.pop %v1129
      %v1161 = vmul.f32 %v1160, 0.6931472
      %v1162 = vlog2.pop %v1131
      %v1163 = vmul.f32 %v1162, 0.6931472
      %v1164 = vlog2.pop %v1133
      %v1165 = vmul.f32 %v1164, 0.6931472
      %v1166 = vlog2.pop %v1135
      %v1167 = vmul.f32 %v1166, 0.6931472
      %v1168 = vlog2.pop %v1137
      %v1169 = vmul.f32 %v1168, 0.6931472
      %v1170 = vsub.f32 %v1058, %v1139
      %v1171 = vsub.f32 %v1059, %v1141
      %v1172 = vsub.f32 %v1060, %v1143
      %v1173 = vsub.f32 %v1061, %v1145
      %v1174 = vsub.f32 %v1062, %v1147
      %v1175 = vsub.f32 %v1063, %v1149
      %v1176 = vsub.f32 %v1064, %v1151
      %v1177 = vsub.f32 %v1065, %v1153
      %v1178 = vsub.f32 %v1066, %v1155
      %v1179 = vsub.f32 %v1067, %v1157
      %v1180 = vsub.f32 %v1068, %v1159
      %v1181 = vsub.f32 %v1069, %v1161
      %v1182 = vsub.f32 %v1070, %v1163
      %v1183 = vsub.f32 %v1071, %v1165
      %v1184 = vsub.f32 %v1072, %v1167
      %v1185 = vsub.f32 %v1073, %v1169
      %1186 = vst [vmem:[%s251] sm:$0xff] %v1170
      %1187 = vst [vmem:[%s251 + $0x8] sm:$0xff] %v1171
      %1188 = vst [vmem:[%s251 + $0x10] sm:$0xff] %v1172
      %1189 = vst [vmem:[%s251 + $0x18] sm:$0xff] %v1173
      %1190 = vst [vmem:[%s251 + $0x20] sm:$0xff] %v1174
      %1191 = vst [vmem:[%s251 + $0x28] sm:$0xff] %v1175
      %1192 = vst [vmem:[%s251 + $0x30] sm:$0xff] %v1176
      %1193 = vst [vmem:[%s251 + $0x38] sm:$0xff] %v1177
      %1194 = vst [vmem:[%s251 + $0x40] sm:$0xff] %v1178
      %1195 = vst [vmem:[%s251 + $0x48] sm:$0xff] %v1179
      %1196 = vst [vmem:[%s251 + $0x50] sm:$0xff] %v1180
      %1197 = vst [vmem:[%s251 + $0x58] sm:$0xff] %v1181
      %1198 = vst [vmem:[%s251 + $0x60] sm:$0xff] %v1182
      %1199 = vst [vmem:[%s251 + $0x68] sm:$0xff] %v1183
      %1200 = vst [vmem:[%s251 + $0x70] sm:$0xff] %v1184
      %1201 = vst [vmem:[%s251 + $0x78] sm:$0xff] %v1185
      %s1202 = smul.u32 16, %s16
      %p1203 = scmp.lt.s32.totalorder %s1202, 31
      %s1204 = scalar_select %p1203, %s1202, 31
      %s1205 = smul.addr %s1204, 8
      %s1206 = scalar_lea.vmem %s5, %s1205
      // Predicated region
      $region41: #{gat_net_forward.3} parent=39 // pred_check
        %p1207 = pneg %p149
      $region42: #{gat_net_forward.3} parent=39 // pred_check_branch
        %1209 = sbr.rel (%p1207) target = $region44
      $region43: #{gat_net_forward.3} parent=39 // pred_region
        %s1210 = smul.u32 16, %s16
      $region44: #{gat_net_forward.3} parent=39 // pred_fallthru
        _
    $region40: #{gat_net_forward.3} parent=5 // pred_fallthru
      _
    %p1211 = scmp.le.s32.totalorder 2, %s11
    // Predicated region
    $region45: #{gat_net_forward.3} parent=5 // pred_check
      %p1212 = pneg %p1211
    $region46: #{gat_net_forward.3} parent=5 // pred_check_branch
      %1214 = sbr.rel (%p1212) target = $region48
    $region47: #{gat_net_forward.3} parent=5 // pred_region
      %s1215 = ssub.s32 %s11, 2
      // Predicated region
      $region49: #{gat_net_forward.3} parent=47 // pred_check
        %p1216 = pneg %p155
      $region50: #{gat_net_forward.3} parent=47 // pred_check_branch
        %1218 = sbr.rel (%p1216) target = $region52
      $region51: #{gat_net_forward.3} parent=47 // pred_region
        %s1219 = smul.u32 16, %s17
        %p1220 = scmp.lt.s32.totalorder %s1219, 31
        %s1221 = scalar_select %p1220, %s1219, 31
        %s1222 = smul.addr %s1221, 8
        %s1223 = scalar_lea.vmem %s5, %s1222
      $region52: #{gat_net_forward.3} parent=47 // pred_fallthru
        _
    $region48: #{gat_net_forward.3} parent=5 // pred_fallthru
      _
  $region6: #{gat_net_forward.3} parent=0 // loop_footer
    %s15 = sadd.s32 1, %s11
  $region7: #{gat_net_forward.3} parent=0 // loop_footer_branch
    %10 = sbr.rel target = $region3
  $region8: #{gat_net_forward.3} parent=0 // loop_exit
    _

</llo_original>
